<compile_context>
chip_gen: v7x
topology: tpu7x:2x2x1
jax: 0.10.0
libtpu: 0.0.40
codegen_flags: <defaults>
</compile_context>

<pallas_src>
import numpy as np

import jax
import jax.numpy as jnp
from jax import lax
from jax.experimental import pallas as pl
from jax.experimental.pallas import tpu as pltpu

# ----------------------------------------------------------------------------
# Model configuration (LeNet_KG(in_chan=4, out_chan=10, imsize=16, k=5))
# ----------------------------------------------------------------------------
BATCH = 2
IN_CHAN = 4
IMSIZE = 16
OUT_CHAN = 10
KSIZE = 5
C1, C2 = 6, 16
NFC1, NFC2 = 120, 84

HP1 = IMSIZE + 2                     # 18: conv1 padded H/W
HO1 = HP1 - KSIZE + 1                # 14: conv1 output H/W
HPOOL1 = HO1 // 2                    # 7 : pooled1 H/W
QMAX = (HP1 + 3) // 4                # 5 : padded rows rounded up to mult of 4
HO2 = HPOOL1 + 2 - KSIZE + 1         # 5 : conv2 output H/W
HPOOL2 = HO2 // 2                    # 2 : pooled2 H (floor mode)
WPOOL2 = 2                           # pooled2 W

L_IN1 = HP1 * IN_CHAN                # 72  conv1 input row width  (w, ci)
L_C1 = 2 * HPOOL1 * C1               # 84  conv1 output row width (dx, pw, co)
L_P1 = HPOOL1 * C1                   # 42  pooled1 row width      (pw, co)
L_C2 = 2 * WPOOL2 * C2               # 64  conv2 output row width (dx, pw2, co)
L_P2 = WPOOL2 * C2                   # 32  pooled2 row width      (pw2, co)
NOUT_PAD = 128                       # lane-dense output slab width

# conv1 output rows grouped by (oh % 4): row counts per class.
_NR = tuple(len([oh for oh in range(HO1) if oh % 4 == r]) for r in range(4))

assert HO1 % 2 == 0 and _NR[0] == _NR[1] and _NR[2] == _NR[3]
assert HPOOL1 == 7 and HO2 == 5 and HPOOL2 == 2        # conv2 slice logic
assert C2 * HPOOL2 * WPOOL2 == 64                      # fc1 in-features
assert NOUT_PAD >= 2 * OUT_CHAN


# ----------------------------------------------------------------------------
# One-time host-side weight re-layout (NOT part of the per-call path)
# ----------------------------------------------------------------------------
def prepare_params(params):
    """Torch-layout params -> fused-kernel layouts (runs once, on host)."""
    w1 = np.asarray(params['conv1_w'], np.float32)   # (C1, CIN, K, K)
    b1 = np.asarray(params['conv1_b'], np.float32)
    w2 = np.asarray(params['conv2_w'], np.float32)   # (C2, C1, K, K)
    b2 = np.asarray(params['conv2_b'], np.float32)
    f1w = np.asarray(params['fc1_w'], np.float32)    # (120, 64)
    f1b = np.asarray(params['fc1_b'], np.float32)
    f2w = np.asarray(params['fc2_w'], np.float32)    # (84, 120)
    f2b = np.asarray(params['fc2_b'], np.float32)
    f3w = np.asarray(params['fc3_w'], np.float32)    # (OC, 84)
    f3b = np.asarray(params['fc3_b'], np.float32)
    f4w = np.asarray(params['fc4_w'], np.float32)
    f4b = np.asarray(params['fc4_b'], np.float32)

    # conv1: per-ky weight (Wp*Cin, 2*Wpool*C1); columns ordered (dx, pw, co)
    # so the 2x2-pool over W is a max of two lane halves.  ky slices are then
    # concatenated along K -> (5*72, 84).
    w1e = np.zeros((KSIZE, L_IN1, L_C1), np.float32)
    for ky in range(KSIZE):
        for dx in range(2):
            for pw in range(HPOOL1):
                ow = 2 * pw + dx
                col0 = dx * HPOOL1 * C1 + pw * C1
                for kx in range(KSIZE):
                    win = ow + kx                          # padded input col
                    row0 = win * IN_CHAN
                    w1e[ky, row0:row0 + IN_CHAN, col0:col0 + C1] = \
                        w1[:, :, ky, kx].T                 # (ci, co)
    w1cat = w1e.reshape(KSIZE * L_IN1, L_C1)               # (360, 84)
    b1t = np.tile(b1, HPOOL1)[None, :]                     # (1, 42)

    # conv2: per-ky weight (Wpool1*C1, 2*Wpool2*C2) acting on UNPADDED pooled1
    # rows (W/H zero-padding folded in), ky-concatenated -> (5*42, 64).
    w2e = np.zeros((KSIZE, L_P1, L_C2), np.float32)
    for ky in range(KSIZE):
        for dx in range(2):
            for pw2 in range(WPOOL2):
                ow2 = 2 * pw2 + dx
                col0 = dx * WPOOL2 * C2 + pw2 * C2
                for kx in range(KSIZE):
                    pw = ow2 + kx - 1                      # unpadded pooled col
                    if 0 <= pw < HPOOL1:
                        row0 = pw * C1
                        w2e[ky, row0:row0 + C1, col0:col0 + C2] = \
                            w2[:, :, ky, kx].T             # (ci, co)
    w2cat = w2e.reshape(KSIZE * L_P1, L_C2)                # (210, 64)
    b2t = np.tile(b2, WPOOL2)[None, :]                     # (1, 32)

    # fc1: fold the torch NCHW .view flatten order into the weight, split by
    # pooled row ph2 and concatenate -> (2*32, 120): one dot, no flatten.
    wfc1 = np.zeros((HPOOL2, L_P2, NFC1), np.float32)
    for ph2 in range(HPOOL2):
        for pw2 in range(WPOOL2):
            for co in range(C2):
                src = co * (HPOOL2 * WPOOL2) + ph2 * WPOOL2 + pw2
                wfc1[ph2, pw2 * C2 + co, :] = f1w[:, src]
    wfc1cat = wfc1.reshape(HPOOL2 * L_P2, NFC1)            # (64, 120)
    bfc1 = f1b[None, :]

    wfc2 = np.ascontiguousarray(f2w.T)                     # (120, 84)
    bfc2 = f2b[None, :]

    # fc3/fc4 merged and zero-padded to 128 columns (lane-dense output slab).
    wfc34p = np.zeros((NFC2, NOUT_PAD), np.float32)
    wfc34p[:, :2 * OUT_CHAN] = np.concatenate([f3w.T, f4w.T], axis=1)
    bfc34p = np.zeros((1, NOUT_PAD), np.float32)
    bfc34p[0, :2 * OUT_CHAN] = np.concatenate([f3b, f4b])

    return dict(
        w1cat=jnp.asarray(w1cat, jnp.bfloat16),
        b1t=jnp.asarray(b1t, jnp.float32),
        w2cat=jnp.asarray(w2cat, jnp.bfloat16),
        b2t=jnp.asarray(b2t, jnp.float32),
        wfc1cat=jnp.asarray(wfc1cat, jnp.bfloat16),
        bfc1=jnp.asarray(bfc1, jnp.float32),
        wfc2=jnp.asarray(wfc2, jnp.bfloat16),
        bfc2=jnp.asarray(bfc2, jnp.float32),
        wfc34p=jnp.asarray(wfc34p, jnp.bfloat16),
        bfc34p=jnp.asarray(bfc34p, jnp.float32),
    )


# ----------------------------------------------------------------------------
# Per-call input preparation (tiny XLA ops, fused into one copy by XLA)
# ----------------------------------------------------------------------------
def _preprocess(x):
    """NCHW -> padded NHWC rows, de-interleaved by (padded row % 4), batch
    innermost so batched group slices inside the kernel are contiguous.

    Returns (4, QMAX*N, HP1*CIN):  xd[r, q*N + b, w*CIN + ci] = padded
    row (4q + r) of sample b.
    """
    n = x.shape[0]
    xt = jnp.transpose(x, (0, 2, 3, 1))                          # NHWC
    pad_bottom = QMAX * 4 - 1 - IMSIZE                           # extra zeros
    xp = jnp.pad(xt, ((0, 0), (1, pad_bottom), (1, 1), (0, 0)))  # (N,20,18,CIN)
    xr = xp.reshape(n, QMAX, 4, L_IN1)                           # rows -> (q,r)
    xr = jnp.transpose(xr, (2, 1, 0, 3))                         # (4,QMAX,N,72)
    return xr.reshape(4, QMAX * n, L_IN1)


# ----------------------------------------------------------------------------
# The fused Pallas kernel (single invocation, whole batch)
# ----------------------------------------------------------------------------
def _lenet_kernel(xd_ref, w1c_ref, b1t_ref, w2c_ref, b2t_ref,
                  wfc1_ref, bfc1_ref, wfc2_ref, bfc2_ref,
                  wfc34_ref, bfc34_ref, out_ref):
    f32, bf16 = jnp.float32, jnp.bfloat16
    n = xd_ref.shape[1] // QMAX          # static batch size

    # ---- conv1 + ReLU + 2x2 max-pool:  4 dots (one per oh%4 group) ---------
    # Output rows are grouped by (oh % 4); the host-side row de-interleave
    # makes every batched (nr*N, 72) ky-slice a contiguous static slice, and
    # the 5 ky slices are lane-concatenated to match the K-concatenated weight.
    def conv1_group(r_o, nr):
        parts = []
        for ky in range(KSIZE):
            t = r_o + ky
            r_i, c = t % 4, t // 4
            parts.append(xd_ref[r_i, c * n:(c + nr) * n, :])     # (nr*n, 72)
        lhs = jnp.concatenate(parts, axis=-1)                    # (nr*n, 360)
        return jnp.dot(lhs.astype(bf16), w1c_ref[...],
                       preferred_element_type=f32)               # (nr*n, 84)

    acc = [conv1_group(r, _NR[r]) for r in range(4)]

    def pool_bias_relu1(m):
        m = jnp.maximum(m[:, :L_P1], m[:, L_P1:])                # pool over dx
        return jnp.maximum(m + b1t_ref[...], 0.0)                # bias + ReLU

    # pool over dy = elementwise max of the matching oh%4 groups
    p1e = pool_bias_relu1(jnp.maximum(acc[0], acc[1]))   # pooled rows {0,2,4,6}: (4n,42)
    p1o = pool_bias_relu1(jnp.maximum(acc[2], acc[3]))   # pooled rows {1,3,5}  : (3n,42)

    # ---- conv2 + ReLU + 2x2 max-pool:  2 dots (even / odd output rows) -----
    # Zero-padded odd pooled rows {-1,1,3,5}, built in registers (no scratch).
    pe = jnp.concatenate([jnp.zeros((n, L_P1), f32), p1o], axis=0)   # (4n, 42)

    def conv2_group(even):
        parts = []
        for ky in range(KSIZE):
            if ky % 2 == 0:
                s = ky // 2
                src = pe if even else p1e
                parts.append(src[s * n:(s + 2) * n, :])
            else:
                s = (ky - 1) // 2
                if even:
                    parts.append(p1e[s * n:(s + 2) * n, :])
                else:
                    parts.append(pe[(s + 1) * n:(s + 3) * n, :])
        lhs = jnp.concatenate(parts, axis=-1)                    # (2n, 210)
        return jnp.dot(lhs.astype(bf16), w2c_ref[...],
                       preferred_element_type=f32)               # (2n, 64)

    m2 = jnp.maximum(conv2_group(True), conv2_group(False))      # pool over dy
    m2 = jnp.maximum(m2[:, :L_P2], m2[:, L_P2:])                 # pool over dx
    p2 = jnp.maximum(m2 + b2t_ref[...], 0.0)                     # (2n, 32)

    # ---- FC head (fc1 -> fc2 -> [dropout: identity in eval] -> fc3/fc4) ----
    hin = jnp.concatenate([p2[0:n, :], p2[n:2 * n, :]], axis=-1)     # (n, 64)
    h1 = jnp.maximum(jnp.dot(hin.astype(bf16), wfc1_ref[...],
                             preferred_element_type=f32)
                     + bfc1_ref[...], 0.0)                           # (n, 120)
    h2 = jnp.maximum(jnp.dot(h1.astype(bf16), wfc2_ref[...],
                             preferred_element_type=f32)
                     + bfc2_ref[...], 0.0)                           # (n, 84)
    # TODO(synk): nn.Dropout(p=0.5) is identity in eval mode; training-mode
    # stochastic dropout (PyTorch RNG) is not reproduced here.
    y = jnp.dot(h2.astype(bf16), wfc34_ref[...],
                preferred_element_type=f32) + bfc34_ref[...]         # (n, 128)
    out_ref[...] = y                                                 # lane-dense


def _fused_forward(xd, p, n):
    conv1_macs = HO1 * n * (KSIZE * L_IN1) * L_C1
    conv2_macs = 2 * (2 * n) * (KSIZE * L_P1) * L_C2
    fc_macs = n * (HPOOL2 * L_P2 * NFC1 + NFC1 * NFC2 + NFC2 * NOUT_PAD)
    flops = 2 * (conv1_macs + conv2_macs + fc_macs)
    weight_bytes = sum(int(v.size) * v.dtype.itemsize for v in p.values())
    bytes_accessed = (int(xd.size) * xd.dtype.itemsize    # input, once
                      + weight_bytes                      # weights, once
                      + n * NOUT_PAD * 4)                 # output

    return pl.pallas_call(
        _lenet_kernel,
        grid=(1,),
        out_shape=jax.ShapeDtypeStruct((n, NOUT_PAD), jnp.float32),
        in_specs=[
            pl.BlockSpec((4, QMAX * n, L_IN1), lambda i: (0, 0, 0)),
            pl.BlockSpec((KSIZE * L_IN1, L_C1), lambda i: (0, 0)),
            pl.BlockSpec((1, L_P1), lambda i: (0, 0)),
            pl.BlockSpec((KSIZE * L_P1, L_C2), lambda i: (0, 0)),
            pl.BlockSpec((1, L_P2), lambda i: (0, 0)),
            pl.BlockSpec((HPOOL2 * L_P2, NFC1), lambda i: (0, 0)),
            pl.BlockSpec((1, NFC1), lambda i: (0, 0)),
            pl.BlockSpec((NFC1, NFC2), lambda i: (0, 0)),
            pl.BlockSpec((1, NFC2), lambda i: (0, 0)),
            pl.BlockSpec((NFC2, NOUT_PAD), lambda i: (0, 0)),
            pl.BlockSpec((1, NOUT_PAD), lambda i: (0, 0)),
        ],
        out_specs=pl.BlockSpec((n, NOUT_PAD), lambda i: (0, 0)),
        compiler_params=pltpu.CompilerParams(
            dimension_semantics=("arbitrary",)),
        cost_estimate=pl.CostEstimate(flops=flops, transcendentals=0,
                                      bytes_accessed=bytes_accessed),
    )(xd, p['w1cat'], p['b1t'], p['w2cat'], p['b2t'],
      p['wfc1cat'], p['bfc1'], p['wfc2'], p['bfc2'],
      p['wfc34p'], p['bfc34p'])


@jax.jit
def lenet_kg_forward(x, prepared):
    n = x.shape[0]
    xd = _preprocess(x)
    out = _fused_forward(xd, prepared, n)                # (N, 128) slab
    return out[:, :OUT_CHAN], out[:, OUT_CHAN:2 * OUT_CHAN]


# ----------------------------------------------------------------------------
# Pure-JAX reference (silent correctness check)
# ----------------------------------------------------------------------------
def lenet_kg_reference(x, params):
    def conv(x, w, b):
        y = lax.conv_general_dilated(
            x, w, (1, 1), ((1, 1), (1, 1)),
            dimension_numbers=('NCHW', 'OIHW', 'NCHW'))
        return jax.nn.relu(y + b.reshape(1, -1, 1, 1))

    def pool(x):
        return lax.reduce_window(x, -jnp.inf, lax.max,
                                 (1, 1, 2, 2), (1, 1, 2, 2), 'VALID')

    y = pool(conv(x, params['conv1_w'], params['conv1_b']))
    y = pool(conv(y, params['conv2_w'], params['conv2_b']))
    y = y.reshape(y.shape[0], -1)
    h1 = jax.nn.relu(y @ params['fc1_w'].T + params['fc1_b'])
    h2 = jax.nn.relu(h1 @ params['fc2_w'].T + params['fc2_b'])
    v = h2 @ params['fc3_w'].T + params['fc3_b']
    s = h2 @ params['fc4_w'].T + params['fc4_b']
    return v, s


# ----------------------------------------------------------------------------
if __name__ == "__main__":
    z = 0.5 * (IMSIZE - 2)
    z = int(0.5 * (z - 2))          # -> 2, so fc1 in-features = 16*2*2 = 64
    assert 16 * z * z == C2 * HPOOL2 * WPOOL2

    key = jax.random.PRNGKey(0)
    keys = jax.random.split(key, 13)

    def init(kk, shape, fan_in):
        return (jax.random.normal(kk, shape, jnp.float32)
                / jnp.sqrt(float(fan_in))).astype(jnp.float32)

    params = {
        'conv1_w': init(keys[0], (C1, IN_CHAN, KSIZE, KSIZE), IN_CHAN * KSIZE * KSIZE),
        'conv1_b': init(keys[1], (C1,), IN_CHAN * KSIZE * KSIZE),
        'conv2_w': init(keys[2], (C2, C1, KSIZE, KSIZE), C1 * KSIZE * KSIZE),
        'conv2_b': init(keys[3], (C2,), C1 * KSIZE * KSIZE),
        'fc1_w': init(keys[4], (NFC1, 16 * z * z), 16 * z * z),
        'fc1_b': init(keys[5], (NFC1,), 16 * z * z),
        'fc2_w': init(keys[6], (NFC2, NFC1), NFC1),
        'fc2_b': init(keys[7], (NFC2,), NFC1),
        'fc3_w': init(keys[8], (OUT_CHAN, NFC2), NFC2),
        'fc3_b': init(keys[9], (OUT_CHAN,), NFC2),
        'fc4_w': init(keys[10], (OUT_CHAN, NFC2), NFC2),
        'fc4_b': init(keys[11], (OUT_CHAN,), NFC2),
    }
    x = jax.random.normal(keys[12], (BATCH, IN_CHAN, IMSIZE, IMSIZE), jnp.float32)

    prepared = prepare_params(params)   # one-time host-side weight re-layout

    v, s = jax.block_until_ready(lenet_kg_forward(x, prepared))

    v_ref, s_ref = lenet_kg_reference(x, params)
    assert v.shape == (BATCH, OUT_CHAN) and s.shape == (BATCH, OUT_CHAN)
    assert bool(jnp.all(jnp.isfinite(v))) and bool(jnp.all(jnp.isfinite(s)))
    # Tolerance widened slightly (1e-2 -> 2e-2) for bf16 MXU matmul inputs.
    assert bool(jnp.allclose(v, v_ref, rtol=2e-2, atol=2e-2))
    assert bool(jnp.allclose(s, s_ref, rtol=2e-2, atol=2e-2))

    print("KERNEL_OK")
</pallas_src>

<mosaic_0001>
module attributes {stable_mosaic.version = 11 : i64} {
  func.func @_lenet_kernel(%arg0: i32, %arg1: memref<4x10x72xf32, #tpu.memory_space<vmem>>, %arg2: memref<360x84xbf16, #tpu.memory_space<vmem>>, %arg3: memref<1x42xf32, #tpu.memory_space<vmem>>, %arg4: memref<210x64xbf16, #tpu.memory_space<vmem>>, %arg5: memref<1x32xf32, #tpu.memory_space<vmem>>, %arg6: memref<64x120xbf16, #tpu.memory_space<vmem>>, %arg7: memref<1x120xf32, #tpu.memory_space<vmem>>, %arg8: memref<120x84xbf16, #tpu.memory_space<vmem>>, %arg9: memref<1x84xf32, #tpu.memory_space<vmem>>, %arg10: memref<84x128xbf16, #tpu.memory_space<vmem>>, %arg11: memref<1x128xf32, #tpu.memory_space<vmem>>, %arg12: memref<2x128xf32, #tpu.memory_space<vmem>>) attributes {dimension_semantics = [#tpu.dimension_semantics<arbitrary>], iteration_bounds = array<i64: 1>, scalar_prefetch = 0 : i64, scratch_operands = 0 : i64, tpu.core_type = #tpu.core_type<tc>, window_params = [{pipeline_mode = #tpu.pipeline_mode<synchronous>, transform_indices = @transform_0, window_bounds = array<i64: 4, 10, 72>}, {pipeline_mode = #tpu.pipeline_mode<synchronous>, transform_indices = @transform_1, window_bounds = array<i64: 360, 84>}, {pipeline_mode = #tpu.pipeline_mode<synchronous>, transform_indices = @transform_2, window_bounds = array<i64: 1, 42>}, {pipeline_mode = #tpu.pipeline_mode<synchronous>, transform_indices = @transform_3, window_bounds = array<i64: 210, 64>}, {pipeline_mode = #tpu.pipeline_mode<synchronous>, transform_indices = @transform_4, window_bounds = array<i64: 1, 32>}, {pipeline_mode = #tpu.pipeline_mode<synchronous>, transform_indices = @transform_5, window_bounds = array<i64: 64, 120>}, {pipeline_mode = #tpu.pipeline_mode<synchronous>, transform_indices = @transform_6, window_bounds = array<i64: 1, 120>}, {pipeline_mode = #tpu.pipeline_mode<synchronous>, transform_indices = @transform_7, window_bounds = array<i64: 120, 84>}, {pipeline_mode = #tpu.pipeline_mode<synchronous>, transform_indices = @transform_8, window_bounds = array<i64: 1, 84>}, {pipeline_mode = #tpu.pipeline_mode<synchronous>, transform_indices = @transform_9, window_bounds = array<i64: 84, 128>}, {pipeline_mode = #tpu.pipeline_mode<synchronous>, transform_indices = @transform_10, window_bounds = array<i64: 1, 128>}, {pipeline_mode = #tpu.pipeline_mode<synchronous>, transform_indices = @transform_11, window_bounds = array<i64: 2, 128>}]} {
    %c0 = arith.constant 0 : index
    %c0_0 = arith.constant 0 : index
    %c0_1 = arith.constant 0 : index
    %0 = vector.load %arg1[%c0, %c0_0, %c0_1] : memref<4x10x72xf32, #tpu.memory_space<vmem>>, vector<1x8x72xf32>
    %1 = vector.shape_cast %0 : vector<1x8x72xf32> to vector<8x72xf32>
    %c1 = arith.constant 1 : index
    %c0_2 = arith.constant 0 : index
    %c0_3 = arith.constant 0 : index
    %2 = vector.load %arg1[%c1, %c0_2, %c0_3] : memref<4x10x72xf32, #tpu.memory_space<vmem>>, vector<1x8x72xf32>
    %3 = vector.shape_cast %2 : vector<1x8x72xf32> to vector<8x72xf32>
    %c2 = arith.constant 2 : index
    %c0_4 = arith.constant 0 : index
    %c0_5 = arith.constant 0 : index
    %4 = vector.load %arg1[%c2, %c0_4, %c0_5] : memref<4x10x72xf32, #tpu.memory_space<vmem>>, vector<1x8x72xf32>
    %5 = vector.shape_cast %4 : vector<1x8x72xf32> to vector<8x72xf32>
    %c3 = arith.constant 3 : index
    %c0_6 = arith.constant 0 : index
    %c0_7 = arith.constant 0 : index
    %6 = vector.load %arg1[%c3, %c0_6, %c0_7] : memref<4x10x72xf32, #tpu.memory_space<vmem>>, vector<1x8x72xf32>
    %7 = vector.shape_cast %6 : vector<1x8x72xf32> to vector<8x72xf32>
    %c0_8 = arith.constant 0 : index
    %c2_9 = arith.constant 2 : index
    %c0_10 = arith.constant 0 : index
    %8 = vector.load %arg1[%c0_8, %c2_9, %c0_10] : memref<4x10x72xf32, #tpu.memory_space<vmem>>, vector<1x8x72xf32>
    %9 = vector.shape_cast %8 : vector<1x8x72xf32> to vector<8x72xf32>
    %10 = tpu.concatenate %1, %3, %5, %7, %9 in 1 : vector<8x72xf32>, vector<8x72xf32>, vector<8x72xf32>, vector<8x72xf32>, vector<8x72xf32> -> vector<8x360xf32>
    %11 = arith.truncf %10 : vector<8x360xf32> to vector<8x360xbf16>
    %c0_11 = arith.constant 0 : index
    %c0_12 = arith.constant 0 : index
    %12 = vector.load %arg2[%c0_11, %c0_12] : memref<360x84xbf16, #tpu.memory_space<vmem>>, vector<360x84xbf16>
    %cst = arith.constant dense<0.000000e+00> : vector<8x84xf32>
    %13 = tpu.matmul %11, %12, %cst {dimension_numbers = #tpu.dot_dimension_numbers<[1], [0], [0], [1], [0, 0, 1, 1], [], []>} : vector<8x360xbf16>, vector<360x84xbf16>, vector<8x84xf32> -> vector<8x84xf32>
    %c1_13 = arith.constant 1 : index
    %c0_14 = arith.constant 0 : index
    %c0_15 = arith.constant 0 : index
    %14 = vector.load %arg1[%c1_13, %c0_14, %c0_15] : memref<4x10x72xf32, #tpu.memory_space<vmem>>, vector<1x8x72xf32>
    %15 = vector.shape_cast %14 : vector<1x8x72xf32> to vector<8x72xf32>
    %c2_16 = arith.constant 2 : index
    %c0_17 = arith.constant 0 : index
    %c0_18 = arith.constant 0 : index
    %16 = vector.load %arg1[%c2_16, %c0_17, %c0_18] : memref<4x10x72xf32, #tpu.memory_space<vmem>>, vector<1x8x72xf32>
    %17 = vector.shape_cast %16 : vector<1x8x72xf32> to vector<8x72xf32>
    %c3_19 = arith.constant 3 : index
    %c0_20 = arith.constant 0 : index
    %c0_21 = arith.constant 0 : index
    %18 = vector.load %arg1[%c3_19, %c0_20, %c0_21] : memref<4x10x72xf32, #tpu.memory_space<vmem>>, vector<1x8x72xf32>
    %19 = vector.shape_cast %18 : vector<1x8x72xf32> to vector<8x72xf32>
    %c0_22 = arith.constant 0 : index
    %c2_23 = arith.constant 2 : index
    %c0_24 = arith.constant 0 : index
    %20 = vector.load %arg1[%c0_22, %c2_23, %c0_24] : memref<4x10x72xf32, #tpu.memory_space<vmem>>, vector<1x8x72xf32>
    %21 = vector.shape_cast %20 : vector<1x8x72xf32> to vector<8x72xf32>
    %c1_25 = arith.constant 1 : index
    %c2_26 = arith.constant 2 : index
    %c0_27 = arith.constant 0 : index
    %22 = vector.load %arg1[%c1_25, %c2_26, %c0_27] : memref<4x10x72xf32, #tpu.memory_space<vmem>>, vector<1x8x72xf32>
    %23 = vector.shape_cast %22 : vector<1x8x72xf32> to vector<8x72xf32>
    %24 = tpu.concatenate %15, %17, %19, %21, %23 in 1 : vector<8x72xf32>, vector<8x72xf32>, vector<8x72xf32>, vector<8x72xf32>, vector<8x72xf32> -> vector<8x360xf32>
    %25 = arith.truncf %24 : vector<8x360xf32> to vector<8x360xbf16>
    %c0_28 = arith.constant 0 : index
    %c0_29 = arith.constant 0 : index
    %26 = vector.load %arg2[%c0_28, %c0_29] : memref<360x84xbf16, #tpu.memory_space<vmem>>, vector<360x84xbf16>
    %cst_30 = arith.constant dense<0.000000e+00> : vector<8x84xf32>
    %27 = tpu.matmul %25, %26, %cst_30 {dimension_numbers = #tpu.dot_dimension_numbers<[1], [0], [0], [1], [0, 0, 1, 1], [], []>} : vector<8x360xbf16>, vector<360x84xbf16>, vector<8x84xf32> -> vector<8x84xf32>
    %c2_31 = arith.constant 2 : index
    %c0_32 = arith.constant 0 : index
    %c0_33 = arith.constant 0 : index
    %28 = vector.load %arg1[%c2_31, %c0_32, %c0_33] : memref<4x10x72xf32, #tpu.memory_space<vmem>>, vector<1x6x72xf32>
    %29 = vector.shape_cast %28 : vector<1x6x72xf32> to vector<6x72xf32>
    %c3_34 = arith.constant 3 : index
    %c0_35 = arith.constant 0 : index
    %c0_36 = arith.constant 0 : index
    %30 = vector.load %arg1[%c3_34, %c0_35, %c0_36] : memref<4x10x72xf32, #tpu.memory_space<vmem>>, vector<1x6x72xf32>
    %31 = vector.shape_cast %30 : vector<1x6x72xf32> to vector<6x72xf32>
    %c0_37 = arith.constant 0 : index
    %c2_38 = arith.constant 2 : index
    %c0_39 = arith.constant 0 : index
    %32 = vector.load %arg1[%c0_37, %c2_38, %c0_39] : memref<4x10x72xf32, #tpu.memory_space<vmem>>, vector<1x6x72xf32>
    %33 = vector.shape_cast %32 : vector<1x6x72xf32> to vector<6x72xf32>
    %c1_40 = arith.constant 1 : index
    %c2_41 = arith.constant 2 : index
    %c0_42 = arith.constant 0 : index
    %34 = vector.load %arg1[%c1_40, %c2_41, %c0_42] : memref<4x10x72xf32, #tpu.memory_space<vmem>>, vector<1x6x72xf32>
    %35 = vector.shape_cast %34 : vector<1x6x72xf32> to vector<6x72xf32>
    %c2_43 = arith.constant 2 : index
    %c2_44 = arith.constant 2 : index
    %c0_45 = arith.constant 0 : index
    %36 = vector.load %arg1[%c2_43, %c2_44, %c0_45] : memref<4x10x72xf32, #tpu.memory_space<vmem>>, vector<1x6x72xf32>
    %37 = vector.shape_cast %36 : vector<1x6x72xf32> to vector<6x72xf32>
    %38 = tpu.concatenate %29, %31, %33, %35, %37 in 1 : vector<6x72xf32>, vector<6x72xf32>, vector<6x72xf32>, vector<6x72xf32>, vector<6x72xf32> -> vector<6x360xf32>
    %39 = arith.truncf %38 : vector<6x360xf32> to vector<6x360xbf16>
    %c0_46 = arith.constant 0 : index
    %c0_47 = arith.constant 0 : index
    %40 = vector.load %arg2[%c0_46, %c0_47] : memref<360x84xbf16, #tpu.memory_space<vmem>>, vector<360x84xbf16>
    %cst_48 = arith.constant dense<0.000000e+00> : vector<6x84xf32>
    %41 = tpu.matmul %39, %40, %cst_48 {dimension_numbers = #tpu.dot_dimension_numbers<[1], [0], [0], [1], [0, 0, 1, 1], [], []>} : vector<6x360xbf16>, vector<360x84xbf16>, vector<6x84xf32> -> vector<6x84xf32>
    %c3_49 = arith.constant 3 : index
    %c0_50 = arith.constant 0 : index
    %c0_51 = arith.constant 0 : index
    %42 = vector.load %arg1[%c3_49, %c0_50, %c0_51] : memref<4x10x72xf32, #tpu.memory_space<vmem>>, vector<1x6x72xf32>
    %43 = vector.shape_cast %42 : vector<1x6x72xf32> to vector<6x72xf32>
    %c0_52 = arith.constant 0 : index
    %c2_53 = arith.constant 2 : index
    %c0_54 = arith.constant 0 : index
    %44 = vector.load %arg1[%c0_52, %c2_53, %c0_54] : memref<4x10x72xf32, #tpu.memory_space<vmem>>, vector<1x6x72xf32>
    %45 = vector.shape_cast %44 : vector<1x6x72xf32> to vector<6x72xf32>
    %c1_55 = arith.constant 1 : index
    %c2_56 = arith.constant 2 : index
    %c0_57 = arith.constant 0 : index
    %46 = vector.load %arg1[%c1_55, %c2_56, %c0_57] : memref<4x10x72xf32, #tpu.memory_space<vmem>>, vector<1x6x72xf32>
    %47 = vector.shape_cast %46 : vector<1x6x72xf32> to vector<6x72xf32>
    %c2_58 = arith.constant 2 : index
    %c2_59 = arith.constant 2 : index
    %c0_60 = arith.constant 0 : index
    %48 = vector.load %arg1[%c2_58, %c2_59, %c0_60] : memref<4x10x72xf32, #tpu.memory_space<vmem>>, vector<1x6x72xf32>
    %49 = vector.shape_cast %48 : vector<1x6x72xf32> to vector<6x72xf32>
    %c3_61 = arith.constant 3 : index
    %c2_62 = arith.constant 2 : index
    %c0_63 = arith.constant 0 : index
    %50 = vector.load %arg1[%c3_61, %c2_62, %c0_63] : memref<4x10x72xf32, #tpu.memory_space<vmem>>, vector<1x6x72xf32>
    %51 = vector.shape_cast %50 : vector<1x6x72xf32> to vector<6x72xf32>
    %52 = tpu.concatenate %43, %45, %47, %49, %51 in 1 : vector<6x72xf32>, vector<6x72xf32>, vector<6x72xf32>, vector<6x72xf32>, vector<6x72xf32> -> vector<6x360xf32>
    %53 = arith.truncf %52 : vector<6x360xf32> to vector<6x360xbf16>
    %c0_64 = arith.constant 0 : index
    %c0_65 = arith.constant 0 : index
    %54 = vector.load %arg2[%c0_64, %c0_65] : memref<360x84xbf16, #tpu.memory_space<vmem>>, vector<360x84xbf16>
    %cst_66 = arith.constant dense<0.000000e+00> : vector<6x84xf32>
    %55 = tpu.matmul %53, %54, %cst_66 {dimension_numbers = #tpu.dot_dimension_numbers<[1], [0], [0], [1], [0, 0, 1, 1], [], []>} : vector<6x360xbf16>, vector<360x84xbf16>, vector<6x84xf32> -> vector<6x84xf32>
    %56 = arith.maximumf %13, %27 : vector<8x84xf32>
    %57 = vector.extract_strided_slice %56 {offsets = [0, 0], sizes = [8, 42], strides = [1, 1]} : vector<8x84xf32> to vector<8x42xf32>
    %58 = vector.extract_strided_slice %56 {offsets = [0, 42], sizes = [8, 42], strides = [1, 1]} : vector<8x84xf32> to vector<8x42xf32>
    %59 = arith.maximumf %57, %58 : vector<8x42xf32>
    %c0_67 = arith.constant 0 : index
    %c0_68 = arith.constant 0 : index
    %60 = vector.load %arg3[%c0_67, %c0_68] : memref<1x42xf32, #tpu.memory_space<vmem>>, vector<1x42xf32>
    %61 = vector.broadcast %60 : vector<1x42xf32> to vector<8x42xf32>
    %62 = arith.addf %59, %61 : vector<8x42xf32>
    %cst_69 = arith.constant 0.000000e+00 : f32
    %63 = vector.broadcast %cst_69 : f32 to vector<8x42xf32>
    %64 = arith.maximumf %62, %63 : vector<8x42xf32>
    %65 = arith.maximumf %41, %55 : vector<6x84xf32>
    %66 = vector.extract_strided_slice %65 {offsets = [0, 0], sizes = [6, 42], strides = [1, 1]} : vector<6x84xf32> to vector<6x42xf32>
    %67 = vector.extract_strided_slice %65 {offsets = [0, 42], sizes = [6, 42], strides = [1, 1]} : vector<6x84xf32> to vector<6x42xf32>
    %68 = arith.maximumf %66, %67 : vector<6x42xf32>
    %c0_70 = arith.constant 0 : index
    %c0_71 = arith.constant 0 : index
    %69 = vector.load %arg3[%c0_70, %c0_71] : memref<1x42xf32, #tpu.memory_space<vmem>>, vector<1x42xf32>
    %70 = vector.broadcast %69 : vector<1x42xf32> to vector<6x42xf32>
    %71 = arith.addf %68, %70 : vector<6x42xf32>
    %cst_72 = arith.constant 0.000000e+00 : f32
    %72 = vector.broadcast %cst_72 : f32 to vector<6x42xf32>
    %73 = arith.maximumf %71, %72 : vector<6x42xf32>
    %cst_73 = arith.constant 0.000000e+00 : f32
    %74 = vector.broadcast %cst_73 : f32 to vector<2x42xf32>
    %75 = tpu.concatenate %74, %73 in 0 : vector<2x42xf32>, vector<6x42xf32> -> vector<8x42xf32>
    %76 = vector.extract_strided_slice %75 {offsets = [0, 0], sizes = [4, 42], strides = [1, 1]} : vector<8x42xf32> to vector<4x42xf32>
    %77 = vector.extract_strided_slice %64 {offsets = [0, 0], sizes = [4, 42], strides = [1, 1]} : vector<8x42xf32> to vector<4x42xf32>
    %78 = vector.extract_strided_slice %75 {offsets = [2, 0], sizes = [4, 42], strides = [1, 1]} : vector<8x42xf32> to vector<4x42xf32>
    %79 = vector.extract_strided_slice %64 {offsets = [2, 0], sizes = [4, 42], strides = [1, 1]} : vector<8x42xf32> to vector<4x42xf32>
    %80 = vector.extract_strided_slice %75 {offsets = [4, 0], sizes = [4, 42], strides = [1, 1]} : vector<8x42xf32> to vector<4x42xf32>
    %81 = tpu.concatenate %76, %77, %78, %79, %80 in 1 : vector<4x42xf32>, vector<4x42xf32>, vector<4x42xf32>, vector<4x42xf32>, vector<4x42xf32> -> vector<4x210xf32>
    %82 = arith.truncf %81 : vector<4x210xf32> to vector<4x210xbf16>
    %c0_74 = arith.constant 0 : index
    %c0_75 = arith.constant 0 : index
    %83 = vector.load %arg4[%c0_74, %c0_75] : memref<210x64xbf16, #tpu.memory_space<vmem>>, vector<210x64xbf16>
    %cst_76 = arith.constant dense<0.000000e+00> : vector<4x64xf32>
    %84 = tpu.matmul %82, %83, %cst_76 {dimension_numbers = #tpu.dot_dimension_numbers<[1], [0], [0], [1], [0, 0, 1, 1], [], []>} : vector<4x210xbf16>, vector<210x64xbf16>, vector<4x64xf32> -> vector<4x64xf32>
    %85 = vector.extract_strided_slice %64 {offsets = [0, 0], sizes = [4, 42], strides = [1, 1]} : vector<8x42xf32> to vector<4x42xf32>
    %86 = vector.extract_strided_slice %75 {offsets = [2, 0], sizes = [4, 42], strides = [1, 1]} : vector<8x42xf32> to vector<4x42xf32>
    %87 = vector.extract_strided_slice %64 {offsets = [2, 0], sizes = [4, 42], strides = [1, 1]} : vector<8x42xf32> to vector<4x42xf32>
    %88 = vector.extract_strided_slice %75 {offsets = [4, 0], sizes = [4, 42], strides = [1, 1]} : vector<8x42xf32> to vector<4x42xf32>
    %89 = vector.extract_strided_slice %64 {offsets = [4, 0], sizes = [4, 42], strides = [1, 1]} : vector<8x42xf32> to vector<4x42xf32>
    %90 = tpu.concatenate %85, %86, %87, %88, %89 in 1 : vector<4x42xf32>, vector<4x42xf32>, vector<4x42xf32>, vector<4x42xf32>, vector<4x42xf32> -> vector<4x210xf32>
    %91 = arith.truncf %90 : vector<4x210xf32> to vector<4x210xbf16>
    %c0_77 = arith.constant 0 : index
    %c0_78 = arith.constant 0 : index
    %92 = vector.load %arg4[%c0_77, %c0_78] : memref<210x64xbf16, #tpu.memory_space<vmem>>, vector<210x64xbf16>
    %cst_79 = arith.constant dense<0.000000e+00> : vector<4x64xf32>
    %93 = tpu.matmul %91, %92, %cst_79 {dimension_numbers = #tpu.dot_dimension_numbers<[1], [0], [0], [1], [0, 0, 1, 1], [], []>} : vector<4x210xbf16>, vector<210x64xbf16>, vector<4x64xf32> -> vector<4x64xf32>
    %94 = arith.maximumf %84, %93 : vector<4x64xf32>
    %95 = vector.extract_strided_slice %94 {offsets = [0, 0], sizes = [4, 32], strides = [1, 1]} : vector<4x64xf32> to vector<4x32xf32>
    %96 = vector.extract_strided_slice %94 {offsets = [0, 32], sizes = [4, 32], strides = [1, 1]} : vector<4x64xf32> to vector<4x32xf32>
    %97 = arith.maximumf %95, %96 : vector<4x32xf32>
    %c0_80 = arith.constant 0 : index
    %c0_81 = arith.constant 0 : index
    %98 = vector.load %arg5[%c0_80, %c0_81] : memref<1x32xf32, #tpu.memory_space<vmem>>, vector<1x32xf32>
    %99 = vector.broadcast %98 : vector<1x32xf32> to vector<4x32xf32>
    %100 = arith.addf %97, %99 : vector<4x32xf32>
    %cst_82 = arith.constant 0.000000e+00 : f32
    %101 = vector.broadcast %cst_82 : f32 to vector<4x32xf32>
    %102 = arith.maximumf %100, %101 : vector<4x32xf32>
    %103 = vector.extract_strided_slice %102 {offsets = [0, 0], sizes = [2, 32], strides = [1, 1]} : vector<4x32xf32> to vector<2x32xf32>
    %104 = vector.extract_strided_slice %102 {offsets = [2, 0], sizes = [2, 32], strides = [1, 1]} : vector<4x32xf32> to vector<2x32xf32>
    %105 = tpu.concatenate %103, %104 in 1 : vector<2x32xf32>, vector<2x32xf32> -> vector<2x64xf32>
    %106 = arith.truncf %105 : vector<2x64xf32> to vector<2x64xbf16>
    %c0_83 = arith.constant 0 : index
    %c0_84 = arith.constant 0 : index
    %107 = vector.load %arg6[%c0_83, %c0_84] : memref<64x120xbf16, #tpu.memory_space<vmem>>, vector<64x120xbf16>
    %cst_85 = arith.constant dense<0.000000e+00> : vector<2x120xf32>
    %108 = tpu.matmul %106, %107, %cst_85 {dimension_numbers = #tpu.dot_dimension_numbers<[1], [0], [0], [1], [0, 0, 1, 1], [], []>} : vector<2x64xbf16>, vector<64x120xbf16>, vector<2x120xf32> -> vector<2x120xf32>
    %c0_86 = arith.constant 0 : index
    %c0_87 = arith.constant 0 : index
    %109 = vector.load %arg7[%c0_86, %c0_87] : memref<1x120xf32, #tpu.memory_space<vmem>>, vector<1x120xf32>
    %110 = vector.broadcast %109 : vector<1x120xf32> to vector<2x120xf32>
    %111 = arith.addf %108, %110 : vector<2x120xf32>
    %cst_88 = arith.constant 0.000000e+00 : f32
    %112 = vector.broadcast %cst_88 : f32 to vector<2x120xf32>
    %113 = arith.maximumf %111, %112 : vector<2x120xf32>
    %114 = arith.truncf %113 : vector<2x120xf32> to vector<2x120xbf16>
    %c0_89 = arith.constant 0 : index
    %c0_90 = arith.constant 0 : index
    %115 = vector.load %arg8[%c0_89, %c0_90] : memref<120x84xbf16, #tpu.memory_space<vmem>>, vector<120x84xbf16>
    %cst_91 = arith.constant dense<0.000000e+00> : vector<2x84xf32>
    %116 = tpu.matmul %114, %115, %cst_91 {dimension_numbers = #tpu.dot_dimension_numbers<[1], [0], [0], [1], [0, 0, 1, 1], [], []>} : vector<2x120xbf16>, vector<120x84xbf16>, vector<2x84xf32> -> vector<2x84xf32>
    %c0_92 = arith.constant 0 : index
    %c0_93 = arith.constant 0 : index
    %117 = vector.load %arg9[%c0_92, %c0_93] : memref<1x84xf32, #tpu.memory_space<vmem>>, vector<1x84xf32>
    %118 = vector.broadcast %117 : vector<1x84xf32> to vector<2x84xf32>
    %119 = arith.addf %116, %118 : vector<2x84xf32>
    %cst_94 = arith.constant 0.000000e+00 : f32
    %120 = vector.broadcast %cst_94 : f32 to vector<2x84xf32>
    %121 = arith.maximumf %119, %120 : vector<2x84xf32>
    %122 = arith.truncf %121 : vector<2x84xf32> to vector<2x84xbf16>
    %c0_95 = arith.constant 0 : index
    %c0_96 = arith.constant 0 : index
    %123 = vector.load %arg10[%c0_95, %c0_96] : memref<84x128xbf16, #tpu.memory_space<vmem>>, vector<84x128xbf16>
    %cst_97 = arith.constant dense<0.000000e+00> : vector<2x128xf32>
    %124 = tpu.matmul %122, %123, %cst_97 {dimension_numbers = #tpu.dot_dimension_numbers<[1], [0], [0], [1], [0, 0, 1, 1], [], []>} : vector<2x84xbf16>, vector<84x128xbf16>, vector<2x128xf32> -> vector<2x128xf32>
    %c0_98 = arith.constant 0 : index
    %c0_99 = arith.constant 0 : index
    %125 = vector.load %arg11[%c0_98, %c0_99] : memref<1x128xf32, #tpu.memory_space<vmem>>, vector<1x128xf32>
    %126 = vector.broadcast %125 : vector<1x128xf32> to vector<2x128xf32>
    %127 = arith.addf %124, %126 : vector<2x128xf32>
    %c0_100 = arith.constant 0 : index
    %c0_101 = arith.constant 0 : index
    %128 = vector.load %arg12[%c0_100, %c0_101] : memref<2x128xf32, #tpu.memory_space<vmem>>, vector<2x128xf32>
    tpu.vector_store %arg12[%c0_100, %c0_101], %127 {strides = array<i32>} : memref<2x128xf32, #tpu.memory_space<vmem>>, vector<2x128xf32>,
    return
  }
  func.func @transform_0(%arg0: i32) -> (i32, i32, i32) {
    %c0_i32 = arith.constant 0 : i32
    %c0_i32_0 = arith.constant 0 : i32
    %c0_i32_1 = arith.constant 0 : i32
    %c0_i32_2 = arith.constant 0 : i32
    return %c0_i32, %c0_i32_0, %c0_i32_1 : i32, i32, i32
  }
  func.func @transform_1(%arg0: i32) -> (i32, i32) {
    %c0_i32 = arith.constant 0 : i32
    %c0_i32_0 = arith.constant 0 : i32
    %c0_i32_1 = arith.constant 0 : i32
    return %c0_i32, %c0_i32_0 : i32, i32
  }
  func.func @transform_2(%arg0: i32) -> (i32, i32) {
    %c0_i32 = arith.constant 0 : i32
    %c0_i32_0 = arith.constant 0 : i32
    %c0_i32_1 = arith.constant 0 : i32
    return %c0_i32, %c0_i32_0 : i32, i32
  }
  func.func @transform_3(%arg0: i32) -> (i32, i32) {
    %c0_i32 = arith.constant 0 : i32
    %c0_i32_0 = arith.constant 0 : i32
    %c0_i32_1 = arith.constant 0 : i32
    return %c0_i32, %c0_i32_0 : i32, i32
  }
  func.func @transform_4(%arg0: i32) -> (i32, i32) {
    %c0_i32 = arith.constant 0 : i32
    %c0_i32_0 = arith.constant 0 : i32
    %c0_i32_1 = arith.constant 0 : i32
    return %c0_i32, %c0_i32_0 : i32, i32
  }
  func.func @transform_5(%arg0: i32) -> (i32, i32) {
    %c0_i32 = arith.constant 0 : i32
    %c0_i32_0 = arith.constant 0 : i32
    %c0_i32_1 = arith.constant 0 : i32
    return %c0_i32, %c0_i32_0 : i32, i32
  }
  func.func @transform_6(%arg0: i32) -> (i32, i32) {
    %c0_i32 = arith.constant 0 : i32
    %c0_i32_0 = arith.constant 0 : i32
    %c0_i32_1 = arith.constant 0 : i32
    return %c0_i32, %c0_i32_0 : i32, i32
  }
  func.func @transform_7(%arg0: i32) -> (i32, i32) {
    %c0_i32 = arith.constant 0 : i32
    %c0_i32_0 = arith.constant 0 : i32
    %c0_i32_1 = arith.constant 0 : i32
    return %c0_i32, %c0_i32_0 : i32, i32
  }
  func.func @transform_8(%arg0: i32) -> (i32, i32) {
    %c0_i32 = arith.constant 0 : i32
    %c0_i32_0 = arith.constant 0 : i32
    %c0_i32_1 = arith.constant 0 : i32
    return %c0_i32, %c0_i32_0 : i32, i32
  }
  func.func @transform_9(%arg0: i32) -> (i32, i32) {
    %c0_i32 = arith.constant 0 : i32
    %c0_i32_0 = arith.constant 0 : i32
    %c0_i32_1 = arith.constant 0 : i32
    return %c0_i32, %c0_i32_0 : i32, i32
  }
  func.func @transform_10(%arg0: i32) -> (i32, i32) {
    %c0_i32 = arith.constant 0 : i32
    %c0_i32_0 = arith.constant 0 : i32
    %c0_i32_1 = arith.constant 0 : i32
    return %c0_i32, %c0_i32_0 : i32, i32
  }
  func.func @transform_11(%arg0: i32) -> (i32, i32) {
    %c0_i32 = arith.constant 0 : i32
    %c0_i32_0 = arith.constant 0 : i32
    %c0_i32_1 = arith.constant 0 : i32
    return %c0_i32, %c0_i32_0 : i32, i32
  }
}

</mosaic_0001>

<llo_original>
// kernel: lenet_kg_forward.1
$region0: #{lenet_kg_forward.1}
  #allocation0 [shape = 'u32[]', space=smem, size = 0x4, offset = 0x4, fixed_abs, tag = 'smem constant byte address 0x4 - core index']
  #allocation1 [shape = 'u32[144,128]{1,0:T(1,128)}', space=vmem, size = 0x12000, scoped, tag = 'internal scratch']
  %s0 = inlined_call_operand.vmem [shape: f32[4,10,72], index: 0, kind: input, shape index: {}]
  %s1 = inlined_call_operand.vmem [shape: bf16[360,84], index: 1, kind: input, shape index: {}]
  %s2 = inlined_call_operand.vmem [shape: f32[1,42], index: 2, kind: input, shape index: {}]
  %s3 = inlined_call_operand.vmem [shape: bf16[210,64], index: 3, kind: input, shape index: {}]
  %s4 = inlined_call_operand.vmem [shape: f32[1,32], index: 4, kind: input, shape index: {}]
  %s5 = inlined_call_operand.vmem [shape: bf16[64,120], index: 5, kind: input, shape index: {}]
  %s6 = inlined_call_operand.vmem [shape: f32[1,120], index: 6, kind: input, shape index: {}]
  %s7 = inlined_call_operand.vmem [shape: bf16[120,84], index: 7, kind: input, shape index: {}]
  %s8 = inlined_call_operand.vmem [shape: f32[1,84], index: 8, kind: input, shape index: {}]
  %s9 = inlined_call_operand.vmem [shape: bf16[84,128], index: 9, kind: input, shape index: {}]
  %s10 = inlined_call_operand.vmem [shape: f32[1,128], index: 10, kind: input, shape index: {}]
  %s11 = inlined_call_operand.vmem [shape: f32[2,128], index: 11, kind: output, shape index: {}]
  %s12 = sld [smem:[#allocation0]]
  $region54: #{lenet_kg_forward.1} parent=0
    _
  %s14 = ssub.s32 1, %s12
  %s15 = scalar_select 0, %s14, %s12
  // Predicated region
  $region2: #{lenet_kg_forward.1} parent=0 // pred_check
    _
  $region3: #{lenet_kg_forward.1} parent=0 // pred_check_branch
    %17 = sbr.rel (0) target = $region5
  $region4: #{lenet_kg_forward.1} parent=0 // pred_region
    _
  $region5: #{lenet_kg_forward.1} parent=0 // pred_fallthru
    _
  // Predicated region
  $region6: #{lenet_kg_forward.1} parent=0 // pred_check
    _
  $region7: #{lenet_kg_forward.1} parent=0 // pred_check_branch
    %19 = sbr.rel (0) target = $region9
  $region8: #{lenet_kg_forward.1} parent=0 // pred_region
    _
  $region9: #{lenet_kg_forward.1} parent=0 // pred_fallthru
    _
  // Predicated region
  $region10: #{lenet_kg_forward.1} parent=0 // pred_check
    _
  $region11: #{lenet_kg_forward.1} parent=0 // pred_check_branch
    %21 = sbr.rel (0) target = $region13
  $region12: #{lenet_kg_forward.1} parent=0 // pred_region
    _
  $region13: #{lenet_kg_forward.1} parent=0 // pred_fallthru
    _
  // Predicated region
  $region14: #{lenet_kg_forward.1} parent=0 // pred_check
    _
  $region15: #{lenet_kg_forward.1} parent=0 // pred_check_branch
    %23 = sbr.rel (0) target = $region17
  $region16: #{lenet_kg_forward.1} parent=0 // pred_region
    _
  $region17: #{lenet_kg_forward.1} parent=0 // pred_fallthru
    _
  // Predicated region
  $region18: #{lenet_kg_forward.1} parent=0 // pred_check
    _
  $region19: #{lenet_kg_forward.1} parent=0 // pred_check_branch
    %25 = sbr.rel (0) target = $region21
  $region20: #{lenet_kg_forward.1} parent=0 // pred_region
    _
  $region21: #{lenet_kg_forward.1} parent=0 // pred_fallthru
    _
  // Predicated region
  $region22: #{lenet_kg_forward.1} parent=0 // pred_check
    _
  $region23: #{lenet_kg_forward.1} parent=0 // pred_check_branch
    %27 = sbr.rel (0) target = $region25
  $region24: #{lenet_kg_forward.1} parent=0 // pred_region
    _
  $region25: #{lenet_kg_forward.1} parent=0 // pred_fallthru
    _
  // Predicated region
  $region26: #{lenet_kg_forward.1} parent=0 // pred_check
    _
  $region27: #{lenet_kg_forward.1} parent=0 // pred_check_branch
    %29 = sbr.rel (0) target = $region29
  $region28: #{lenet_kg_forward.1} parent=0 // pred_region
    _
  $region29: #{lenet_kg_forward.1} parent=0 // pred_fallthru
    _
  // Predicated region
  $region30: #{lenet_kg_forward.1} parent=0 // pred_check
    _
  $region31: #{lenet_kg_forward.1} parent=0 // pred_check_branch
    %31 = sbr.rel (0) target = $region33
  $region32: #{lenet_kg_forward.1} parent=0 // pred_region
    _
  $region33: #{lenet_kg_forward.1} parent=0 // pred_fallthru
    _
  // Predicated region
  $region34: #{lenet_kg_forward.1} parent=0 // pred_check
    _
  $region35: #{lenet_kg_forward.1} parent=0 // pred_check_branch
    %33 = sbr.rel (0) target = $region37
  $region36: #{lenet_kg_forward.1} parent=0 // pred_region
    _
  $region37: #{lenet_kg_forward.1} parent=0 // pred_fallthru
    _
  // Predicated region
  $region38: #{lenet_kg_forward.1} parent=0 // pred_check
    _
  $region39: #{lenet_kg_forward.1} parent=0 // pred_check_branch
    %35 = sbr.rel (0) target = $region41
  $region40: #{lenet_kg_forward.1} parent=0 // pred_region
    _
  $region41: #{lenet_kg_forward.1} parent=0 // pred_fallthru
    _
  // Predicated region
  $region42: #{lenet_kg_forward.1} parent=0 // pred_check
    _
  $region43: #{lenet_kg_forward.1} parent=0 // pred_check_branch
    %37 = sbr.rel (0) target = $region45
  $region44: #{lenet_kg_forward.1} parent=0 // pred_region
    _
  $region45: #{lenet_kg_forward.1} parent=0 // pred_fallthru
    _
  %v39 = vld [vmem:[%s0] sm:$0xff]
  %s40 = scalar_lea.vmem %s0, 16
  %v41 = vld [vmem:[%s40] sm:$0xff]
  %s42 = scalar_lea.vmem %s0, 32
  %v43 = vld [vmem:[%s42] sm:$0xff]
  %s44 = scalar_lea.vmem %s0, 48
  %v45 = vld [vmem:[%s44] sm:$0xff]
  %v46 = vld [vmem:[%s0 + $0x2] sm:$0xff]
  %48 = vrot.lane.b32.xlu0 %v41, 72
  %v49 = vpop.permute.xlu0 %48
  %52 = vrot.lane.b32.xlu0 %v43, 16
  %v53 = vpop.permute.xlu0 %52
  %56 = vrot.lane.b32.xlu0 %v45, 88
  %v57 = vpop.permute.xlu0 %56
  %60 = vrot.lane.b32.xlu0 %v46, 32
  %v61 = vpop.permute.xlu0 %60
  %vm63 = vcmask 588800
  %v64 = vsel %vm63, %v39, %v49
  %vm65 = vcmask 130048
  %v66 = vsel %vm65, %v49, %v53
  %vm67 = vcmask 719872
  %v68 = vsel %vm67, %v66, %v57
  %vm69 = vcmask 261120
  %v70 = vsel %vm69, %v57, %v61
  %v71 = vpack.c.bf16 %v64, %v64
  %v72 = vpack.c.bf16 %v68, %v68
  %v73 = vpack.c.bf16 %v70, %v70
  %v74 = vld [vmem:[%s1] sm:$0xf]
  %v75 = vld [vmem:[%s1 + $0x4] sm:$0xf]
  %v76 = vld [vmem:[%s1 + $0x8] sm:$0xf]
  %v77 = vld [vmem:[%s1 + $0xc] sm:$0xf]
  %v78 = vld [vmem:[%s1 + $0x10] sm:$0xf]
  %v79 = vld [vmem:[%s1 + $0x14] sm:$0xf]
  %v80 = vld [vmem:[%s1 + $0x18] sm:$0xf]
  %v81 = vld [vmem:[%s1 + $0x1c] sm:$0xf]
  %v82 = vld [vmem:[%s1 + $0x20] sm:$0xf]
  %v83 = vld [vmem:[%s1 + $0x24] sm:$0xf]
  %v84 = vld [vmem:[%s1 + $0x28] sm:$0xf]
  %v85 = vld [vmem:[%s1 + $0x2c] sm:$0xf]
  %v86 = vld [vmem:[%s1 + $0x30] sm:$0xf]
  %v87 = vld [vmem:[%s1 + $0x34] sm:$0xf]
  %v88 = vld [vmem:[%s1 + $0x38] sm:$0xf]
  %v89 = vld [vmem:[%s1 + $0x3c] sm:$0xf]
  %v90 = vld [vmem:[%s1 + $0x40] sm:$0xf]
  %v91 = vld [vmem:[%s1 + $0x44] sm:$0xf]
  %v92 = vld [vmem:[%s1 + $0x48] sm:$0xf]
  %v93 = vld [vmem:[%s1 + $0x4c] sm:$0xf]
  %v94 = vld [vmem:[%s1 + $0x50] sm:$0xf]
  %v95 = vld [vmem:[%s1 + $0x54] sm:$0xf]
  %v96 = vld [vmem:[%s1 + $0x58] sm:$0xf]
  %v97 = vld [vmem:[%s1 + $0x5c] sm:$0xf]
  %v98 = vld [vmem:[%s1 + $0x60] sm:$0xf]
  %v99 = vld [vmem:[%s1 + $0x64] sm:$0xf]
  %v100 = vld [vmem:[%s1 + $0x68] sm:$0xf]
  %v101 = vld [vmem:[%s1 + $0x6c] sm:$0xf]
  %v102 = vld [vmem:[%s1 + $0x70] sm:$0xf]
  %v103 = vld [vmem:[%s1 + $0x74] sm:$0xf]
  %v104 = vld [vmem:[%s1 + $0x78] sm:$0xf]
  %v105 = vld [vmem:[%s1 + $0x7c] sm:$0xf]
  %v106 = vld [vmem:[%s1 + $0x80] sm:$0xf]
  %v107 = vld [vmem:[%s1 + $0x84] sm:$0xf]
  %v108 = vld [vmem:[%s1 + $0x88] sm:$0xf]
  %v109 = vld [vmem:[%s1 + $0x8c] sm:$0xf]
  %v110 = vld [vmem:[%s1 + $0x90] sm:$0xf]
  %v111 = vld [vmem:[%s1 + $0x94] sm:$0xf]
  %v112 = vld [vmem:[%s1 + $0x98] sm:$0xf]
  %v113 = vld [vmem:[%s1 + $0x9c] sm:$0xf]
  %v114 = vld [vmem:[%s1 + $0xa0] sm:$0xf]
  %v115 = vld [vmem:[%s1 + $0xa4] sm:$0xf]
  %v116 = vld [vmem:[%s1 + $0xa8] sm:$0xf]
  %v117 = vld [vmem:[%s1 + $0xac] sm:$0xf]
  %v118 = vld [vmem:[%s1 + $0xb0] sm:$0xf]
  %v164 = vunpack.c.l.b16 %v74
  %v165 = vunpack.c.l.b16 %v75
  %v166 = vunpack.c.l.b16 %v76
  %v167 = vunpack.c.l.b16 %v77
  %v168 = vunpack.c.l.b16 %v78
  %v169 = vunpack.c.l.b16 %v79
  %v170 = vunpack.c.l.b16 %v80
  %v171 = vunpack.c.l.b16 %v81
  %v172 = vunpack.c.l.b16 %v82
  %v173 = vunpack.c.l.b16 %v83
  %v174 = vunpack.c.l.b16 %v84
  %v175 = vunpack.c.l.b16 %v85
  %v176 = vunpack.c.l.b16 %v86
  %v177 = vunpack.c.l.b16 %v87
  %v178 = vunpack.c.l.b16 %v88
  %v179 = vunpack.c.l.b16 %v89
  %v180 = vunpack.c.l.b16 %v90
  %v181 = vunpack.c.l.b16 %v91
  %v182 = vunpack.c.l.b16 %v92
  %v183 = vunpack.c.l.b16 %v93
  %v184 = vunpack.c.l.b16 %v94
  %v185 = vunpack.c.l.b16 %v95
  %v186 = vunpack.c.l.b16 %v96
  %v187 = vunpack.c.l.b16 %v97
  %v188 = vunpack.c.l.b16 %v98
  %v189 = vunpack.c.l.b16 %v99
  %v190 = vunpack.c.l.b16 %v100
  %v191 = vunpack.c.l.b16 %v101
  %v192 = vunpack.c.l.b16 %v102
  %v193 = vunpack.c.l.b16 %v103
  %v194 = vunpack.c.l.b16 %v104
  %v195 = vunpack.c.l.b16 %v105
  %v196 = vunpack.c.l.b16 %v106
  %v197 = vunpack.c.l.b16 %v107
  %v198 = vunpack.c.l.b16 %v108
  %v199 = vunpack.c.l.b16 %v109
  %v200 = vunpack.c.l.b16 %v110
  %v201 = vunpack.c.l.b16 %v111
  %v202 = vunpack.c.l.b16 %v112
  %v203 = vunpack.c.l.b16 %v113
  %v204 = vunpack.c.l.b16 %v114
  %v205 = vunpack.c.l.b16 %v115
  %v206 = vunpack.c.l.b16 %v116
  %v207 = vunpack.c.l.b16 %v117
  %v208 = vunpack.c.l.b16 %v118
  %v209 = vpack.c.b16 %v165, %v164
  %v210 = vpack.c.b16 %v167, %v166
  %v211 = vpack.c.b16 %v169, %v168
  %v212 = vpack.c.b16 %v171, %v170
  %v213 = vpack.c.b16 %v173, %v172
  %v214 = vpack.c.b16 %v175, %v174
  %v215 = vpack.c.b16 %v177, %v176
  %v216 = vpack.c.b16 %v179, %v178
  %v217 = vpack.c.b16 %v181, %v180
  %v218 = vpack.c.b16 %v183, %v182
  %v219 = vpack.c.b16 %v185, %v184
  %v220 = vpack.c.b16 %v187, %v186
  %v221 = vpack.c.b16 %v189, %v188
  %v222 = vpack.c.b16 %v191, %v190
  %v223 = vpack.c.b16 %v193, %v192
  %v224 = vpack.c.b16 %v195, %v194
  %v225 = vpack.c.b16 %v197, %v196
  %v226 = vpack.c.b16 %v199, %v198
  %v227 = vpack.c.b16 %v201, %v200
  %v228 = vpack.c.b16 %v203, %v202
  %v229 = vpack.c.b16 %v205, %v204
  %v230 = vpack.c.b16 %v207, %v206
  %v231 = vpack.c.b16 %v208, %v208
  %vm254 = vcmask 850944
  %v256 = vsel %vm254, %v73, 0
  %vm258 = vcmask 1043456
  %v260 = vsel %vm258, %v231, 0
  %262 = vmatprep.subr.bf16.mxu0 0
  %263 = vmatpush1.bf16.msra.mxu0 %v209
  %264 = vmatprep.subr.bf16.mxu0 0
  %265 = vmatpush1.bf16.msra.mxu0 %v210
  %266 = vmatprep.subr.bf16.mxu0 0
  %267 = vmatpush1.bf16.msra.mxu0 %v211
  %268 = vmatprep.subr.bf16.mxu0 0
  %269 = vmatpush1.bf16.msra.mxu0 %v212
  %270 = vmatprep.subr.bf16.mxu0 0
  %271 = vmatpush1.bf16.msra.mxu0 %v213
  %272 = vmatprep.subr.bf16.mxu0 0
  %273 = vmatpush1.bf16.msra.mxu0 %v214
  %274 = vmatprep.subr.bf16.mxu0 0
  %275 = vmatpush1.bf16.msra.mxu0 %v215
  %276 = vmatprep.subr.bf16.mxu0 0
  %277 = vmatpush1.bf16.msra.mxu0 %v216
  %278 = vmatprep.subr.bf16.mxu0 0
  %279 = vmatpush1.bf16.msra.mxu0 %v217
  %280 = vmatprep.subr.bf16.mxu0 0
  %281 = vmatpush1.bf16.msra.mxu0 %v218
  %282 = vmatprep.subr.bf16.mxu0 0
  %283 = vmatpush1.bf16.msra.mxu0 %v219
  %284 = vmatprep.subr.bf16.mxu0 0
  %285 = vmatpush1.bf16.msra.mxu0 %v220
  %286 = vmatprep.subr.bf16.mxu0 0
  %287 = vmatpush1.bf16.msra.mxu0 %v221
  %288 = vmatprep.subr.bf16.mxu0 0
  %289 = vmatpush1.bf16.msra.mxu0 %v222
  %290 = vmatprep.subr.bf16.mxu0 0
  %291 = vmatpush1.bf16.msra.mxu0 %v223
  %292 = vmatprep.subr.bf16.mxu0 0
  %293 = vmatpush1.bf16.msra.mxu0 %v224
  %294 = vmatprep.mubr.bf16.mxu0 %v72
  %295 = vmatmul.mubr.bf16.gmra.mrb[0].mxu0 %v71
  %v296 = vpop.f32.mrb[0].mxu0
  %v297 = vadd.f32 0.0, %v296
  %v298 = vpop.f32.mrb[0].mxu0
  %v299 = vpop.f32.mrb[0].mxu0
  %v300 = vpop.f32.mrb[0].mxu0
  %301 = vdwg.mxu0
  %302 = vmatprep.subr.bf16.mxu0 0
  %303 = vmatpush1.bf16.msra.mxu0 %v225
  %304 = vmatprep.subr.bf16.mxu0 0
  %305 = vmatpush1.bf16.msra.mxu0 %v226
  %306 = vmatprep.subr.bf16.mxu0 0
  %307 = vmatpush1.bf16.msra.mxu0 %v227
  %308 = vmatprep.subr.bf16.mxu0 0
  %309 = vmatpush1.bf16.msra.mxu0 %v228
  %310 = vmatprep.subr.bf16.mxu0 0
  %311 = vmatpush1.bf16.msra.mxu0 %v229
  %312 = vmatprep.subr.bf16.mxu0 0
  %313 = vmatpush1.bf16.msra.mxu0 %v230
  %314 = vmatprep.subr.bf16.mxu0 0
  %315 = vmatpush1.bf16.msra.mxu0 %v260
  %316 = vmatprep.subr.bf16.mxu0 0
  %317 = vmatpush1.bf16.msra.mxu0 0
  %318 = vmatprep.subr.bf16.mxu0 0
  %319 = vmatpush1.bf16.msra.mxu0 0
  %320 = vmatprep.subr.bf16.mxu0 0
  %321 = vmatpush1.bf16.msra.mxu0 0
  %322 = vmatprep.subr.bf16.mxu0 0
  %323 = vmatpush1.bf16.msra.mxu0 0
  %324 = vmatprep.subr.bf16.mxu0 0
  %325 = vmatpush1.bf16.msra.mxu0 0
  %326 = vmatprep.subr.bf16.mxu0 0
  %327 = vmatpush1.bf16.msra.mxu0 0
  %328 = vmatprep.subr.bf16.mxu0 0
  %329 = vmatpush1.bf16.msra.mxu0 0
  %330 = vmatprep.subr.bf16.mxu0 0
  %331 = vmatpush1.bf16.msra.mxu0 0
  %332 = vmatprep.subr.bf16.mxu0 0
  %333 = vmatpush1.bf16.msra.mxu0 0
  %334 = vmatprep.mubr.bf16.mxu0 0
  %335 = vmatmul.mubr.bf16.gmra.mrb[0].mxu0 %v256
  %v336 = vpop.f32.mrb[0].mxu0
  %v337 = vadd.f32 %v297, %v336
  %v338 = vpop.f32.mrb[0].mxu0
  %v339 = vpop.f32.mrb[0].mxu0
  %v340 = vpop.f32.mrb[0].mxu0
  %341 = vdwg.mxu0
  %v342 = vld [vmem:[%s40 + $0x2] sm:$0xff]
  %343 = vrot.lane.b32.xlu0 %v43, 72
  %v344 = vpop.permute.xlu0 %343
  %346 = vrot.lane.b32.xlu0 %v45, 16
  %v347 = vpop.permute.xlu0 %346
  %349 = vrot.lane.b32.xlu0 %v46, 88
  %v350 = vpop.permute.xlu0 %349
  %353 = vrot.lane.b32.xlu0 %v342, 32
  %v354 = vpop.permute.xlu0 %353
  %v356 = vsel %vm63, %v41, %v344
  %v357 = vsel %vm65, %v344, %v347
  %v358 = vsel %vm67, %v357, %v350
  %v359 = vsel %vm69, %v350, %v354
  %v360 = vpack.c.bf16 %v356, %v356
  %v361 = vpack.c.bf16 %v358, %v358
  %v362 = vpack.c.bf16 %v359, %v359
  %v364 = vsel %vm254, %v362, 0
  %366 = vmatprep.subr.bf16.mxu0 0
  %367 = vmatpush1.bf16.msra.mxu0 %v209
  %368 = vmatprep.subr.bf16.mxu0 0
  %369 = vmatpush1.bf16.msra.mxu0 %v210
  %370 = vmatprep.subr.bf16.mxu0 0
  %371 = vmatpush1.bf16.msra.mxu0 %v211
  %372 = vmatprep.subr.bf16.mxu0 0
  %373 = vmatpush1.bf16.msra.mxu0 %v212
  %374 = vmatprep.subr.bf16.mxu0 0
  %375 = vmatpush1.bf16.msra.mxu0 %v213
  %376 = vmatprep.subr.bf16.mxu0 0
  %377 = vmatpush1.bf16.msra.mxu0 %v214
  %378 = vmatprep.subr.bf16.mxu0 0
  %379 = vmatpush1.bf16.msra.mxu0 %v215
  %380 = vmatprep.subr.bf16.mxu0 0
  %381 = vmatpush1.bf16.msra.mxu0 %v216
  %382 = vmatprep.subr.bf16.mxu0 0
  %383 = vmatpush1.bf16.msra.mxu0 %v217
  %384 = vmatprep.subr.bf16.mxu0 0
  %385 = vmatpush1.bf16.msra.mxu0 %v218
  %386 = vmatprep.subr.bf16.mxu0 0
  %387 = vmatpush1.bf16.msra.mxu0 %v219
  %388 = vmatprep.subr.bf16.mxu0 0
  %389 = vmatpush1.bf16.msra.mxu0 %v220
  %390 = vmatprep.subr.bf16.mxu0 0
  %391 = vmatpush1.bf16.msra.mxu0 %v221
  %392 = vmatprep.subr.bf16.mxu0 0
  %393 = vmatpush1.bf16.msra.mxu0 %v222
  %394 = vmatprep.subr.bf16.mxu0 0
  %395 = vmatpush1.bf16.msra.mxu0 %v223
  %396 = vmatprep.subr.bf16.mxu0 0
  %397 = vmatpush1.bf16.msra.mxu0 %v224
  %398 = vmatprep.mubr.bf16.mxu0 %v361
  %399 = vmatmul.mubr.bf16.gmra.mrb[0].mxu0 %v360
  %v400 = vpop.f32.mrb[0].mxu0
  %v401 = vadd.f32 0.0, %v400
  %v402 = vpop.f32.mrb[0].mxu0
  %v403 = vpop.f32.mrb[0].mxu0
  %v404 = vpop.f32.mrb[0].mxu0
  %405 = vdwg.mxu0
  %406 = vmatprep.subr.bf16.mxu0 0
  %407 = vmatpush1.bf16.msra.mxu0 %v225
  %408 = vmatprep.subr.bf16.mxu0 0
  %409 = vmatpush1.bf16.msra.mxu0 %v226
  %410 = vmatprep.subr.bf16.mxu0 0
  %411 = vmatpush1.bf16.msra.mxu0 %v227
  %412 = vmatprep.subr.bf16.mxu0 0
  %413 = vmatpush1.bf16.msra.mxu0 %v228
  %414 = vmatprep.subr.bf16.mxu0 0
  %415 = vmatpush1.bf16.msra.mxu0 %v229
  %416 = vmatprep.subr.bf16.mxu0 0
  %417 = vmatpush1.bf16.msra.mxu0 %v230
  %418 = vmatprep.subr.bf16.mxu0 0
  %419 = vmatpush1.bf16.msra.mxu0 %v260
  %420 = vmatprep.subr.bf16.mxu0 0
  %421 = vmatpush1.bf16.msra.mxu0 0
  %422 = vmatprep.subr.bf16.mxu0 0
  %423 = vmatpush1.bf16.msra.mxu0 0
  %424 = vmatprep.subr.bf16.mxu0 0
  %425 = vmatpush1.bf16.msra.mxu0 0
  %426 = vmatprep.subr.bf16.mxu0 0
  %427 = vmatpush1.bf16.msra.mxu0 0
  %428 = vmatprep.subr.bf16.mxu0 0
  %429 = vmatpush1.bf16.msra.mxu0 0
  %430 = vmatprep.subr.bf16.mxu0 0
  %431 = vmatpush1.bf16.msra.mxu0 0
  %432 = vmatprep.subr.bf16.mxu0 0
  %433 = vmatpush1.bf16.msra.mxu0 0
  %434 = vmatprep.subr.bf16.mxu0 0
  %435 = vmatpush1.bf16.msra.mxu0 0
  %436 = vmatprep.subr.bf16.mxu0 0
  %437 = vmatpush1.bf16.msra.mxu0 0
  %438 = vmatprep.mubr.bf16.mxu0 0
  %439 = vmatmul.mubr.bf16.gmra.mrb[0].mxu0 %v364
  %v440 = vpop.f32.mrb[0].mxu0
  %v441 = vadd.f32 %v401, %v440
  %v442 = vpop.f32.mrb[0].mxu0
  %v443 = vpop.f32.mrb[0].mxu0
  %v444 = vpop.f32.mrb[0].mxu0
  %445 = vdwg.mxu0
  %v446 = vld [vmem:[%s42] sm:$0x3f]
  %v447 = vld [vmem:[%s44] sm:$0x3f]
  %v448 = vld [vmem:[%s0 + $0x2] sm:$0x3f]
  %v449 = vld [vmem:[%s40 + $0x2] sm:$0x3f]
  %v450 = vld [vmem:[%s42 + $0x2] sm:$0x3f]
  %452 = vrot.lane.b32.xlu0 %v447, 72
  %v453 = vpop.permute.xlu0 %452
  %456 = vrot.lane.b32.xlu0 %v448, 16
  %v457 = vpop.permute.xlu0 %456
  %460 = vrot.lane.b32.xlu0 %v449, 88
  %v461 = vpop.permute.xlu0 %460
  %464 = vrot.lane.b32.xlu0 %v450, 32
  %v465 = vpop.permute.xlu0 %464
  %v467 = vsel %vm63, %v446, %v453
  %v468 = vsel %vm65, %v453, %v457
  %v469 = vsel %vm67, %v468, %v461
  %v470 = vsel %vm69, %v461, %v465
  %v471 = vpack.c.bf16 %v467, %v467
  %v472 = vpack.c.bf16 %v469, %v469
  %v473 = vpack.c.bf16 %v470, %v470
  %v475 = vsel %vm254, %v473, 0
  %477 = vmatprep.subr.bf16.mxu0 0
  %478 = vmatpush1.bf16.msra.mxu0 %v209
  %479 = vmatprep.subr.bf16.mxu0 0
  %480 = vmatpush1.bf16.msra.mxu0 %v210
  %481 = vmatprep.subr.bf16.mxu0 0
  %482 = vmatpush1.bf16.msra.mxu0 %v211
  %483 = vmatprep.subr.bf16.mxu0 0
  %484 = vmatpush1.bf16.msra.mxu0 %v212
  %485 = vmatprep.subr.bf16.mxu0 0
  %486 = vmatpush1.bf16.msra.mxu0 %v213
  %487 = vmatprep.subr.bf16.mxu0 0
  %488 = vmatpush1.bf16.msra.mxu0 %v214
  %489 = vmatprep.subr.bf16.mxu0 0
  %490 = vmatpush1.bf16.msra.mxu0 %v215
  %491 = vmatprep.subr.bf16.mxu0 0
  %492 = vmatpush1.bf16.msra.mxu0 %v216
  %493 = vmatprep.subr.bf16.mxu0 0
  %494 = vmatpush1.bf16.msra.mxu0 %v217
  %495 = vmatprep.subr.bf16.mxu0 0
  %496 = vmatpush1.bf16.msra.mxu0 %v218
  %497 = vmatprep.subr.bf16.mxu0 0
  %498 = vmatpush1.bf16.msra.mxu0 %v219
  %499 = vmatprep.subr.bf16.mxu0 0
  %500 = vmatpush1.bf16.msra.mxu0 %v220
  %501 = vmatprep.subr.bf16.mxu0 0
  %502 = vmatpush1.bf16.msra.mxu0 %v221
  %503 = vmatprep.subr.bf16.mxu0 0
  %504 = vmatpush1.bf16.msra.mxu0 %v222
  %505 = vmatprep.subr.bf16.mxu0 0
  %506 = vmatpush1.bf16.msra.mxu0 %v223
  %507 = vmatprep.subr.bf16.mxu0 0
  %508 = vmatpush1.bf16.msra.mxu0 %v224
  %509 = vmatprep.mubr.bf16.mxu0 %v472
  %510 = vmatmul.mubr.bf16.gmra.mrb[0].mxu0 %v471
  %v511 = vpop.f32.mrb[0].mxu0
  %v512 = vadd.f32 0.0, %v511
  %v513 = vpop.f32.mrb[0].mxu0
  %v514 = vpop.f32.mrb[0].mxu0
  %v515 = vpop.f32.mrb[0].mxu0
  %516 = vdwg.mxu0
  %517 = vmatprep.subr.bf16.mxu0 0
  %518 = vmatpush1.bf16.msra.mxu0 %v225
  %519 = vmatprep.subr.bf16.mxu0 0
  %520 = vmatpush1.bf16.msra.mxu0 %v226
  %521 = vmatprep.subr.bf16.mxu0 0
  %522 = vmatpush1.bf16.msra.mxu0 %v227
  %523 = vmatprep.subr.bf16.mxu0 0
  %524 = vmatpush1.bf16.msra.mxu0 %v228
  %525 = vmatprep.subr.bf16.mxu0 0
  %526 = vmatpush1.bf16.msra.mxu0 %v229
  %527 = vmatprep.subr.bf16.mxu0 0
  %528 = vmatpush1.bf16.msra.mxu0 %v230
  %529 = vmatprep.subr.bf16.mxu0 0
  %530 = vmatpush1.bf16.msra.mxu0 %v260
  %531 = vmatprep.subr.bf16.mxu0 0
  %532 = vmatpush1.bf16.msra.mxu0 0
  %533 = vmatprep.subr.bf16.mxu0 0
  %534 = vmatpush1.bf16.msra.mxu0 0
  %535 = vmatprep.subr.bf16.mxu0 0
  %536 = vmatpush1.bf16.msra.mxu0 0
  %537 = vmatprep.subr.bf16.mxu0 0
  %538 = vmatpush1.bf16.msra.mxu0 0
  %539 = vmatprep.subr.bf16.mxu0 0
  %540 = vmatpush1.bf16.msra.mxu0 0
  %541 = vmatprep.subr.bf16.mxu0 0
  %542 = vmatpush1.bf16.msra.mxu0 0
  %543 = vmatprep.subr.bf16.mxu0 0
  %544 = vmatpush1.bf16.msra.mxu0 0
  %545 = vmatprep.subr.bf16.mxu0 0
  %546 = vmatpush1.bf16.msra.mxu0 0
  %547 = vmatprep.subr.bf16.mxu0 0
  %548 = vmatpush1.bf16.msra.mxu0 0
  %549 = vmatprep.mubr.bf16.mxu0 0
  %550 = vmatmul.mubr.bf16.gmra.mrb[0].mxu0 %v475
  %v551 = vpop.f32.mrb[0].mxu0
  %v552 = vadd.f32 %v512, %v551
  %v553 = vpop.f32.mrb[0].mxu0
  %v554 = vpop.f32.mrb[0].mxu0
  %v555 = vpop.f32.mrb[0].mxu0
  %556 = vdwg.mxu0
  %v557 = vld [vmem:[%s44 + $0x2] sm:$0x3f]
  %558 = vrot.lane.b32.xlu0 %v448, 72
  %v559 = vpop.permute.xlu0 %558
  %561 = vrot.lane.b32.xlu0 %v449, 16
  %v562 = vpop.permute.xlu0 %561
  %564 = vrot.lane.b32.xlu0 %v450, 88
  %v565 = vpop.permute.xlu0 %564
  %568 = vrot.lane.b32.xlu0 %v557, 32
  %v569 = vpop.permute.xlu0 %568
  %v571 = vsel %vm63, %v447, %v559
  %v572 = vsel %vm65, %v559, %v562
  %v573 = vsel %vm67, %v572, %v565
  %v574 = vsel %vm69, %v565, %v569
  %v575 = vpack.c.bf16 %v571, %v571
  %v576 = vpack.c.bf16 %v573, %v573
  %v577 = vpack.c.bf16 %v574, %v574
  %v579 = vsel %vm254, %v577, 0
  %581 = vmatprep.subr.bf16.mxu0 0
  %582 = vmatpush1.bf16.msra.mxu0 %v209
  %583 = vmatprep.subr.bf16.mxu0 0
  %584 = vmatpush1.bf16.msra.mxu0 %v210
  %585 = vmatprep.subr.bf16.mxu0 0
  %586 = vmatpush1.bf16.msra.mxu0 %v211
  %587 = vmatprep.subr.bf16.mxu0 0
  %588 = vmatpush1.bf16.msra.mxu0 %v212
  %589 = vmatprep.subr.bf16.mxu0 0
  %590 = vmatpush1.bf16.msra.mxu0 %v213
  %591 = vmatprep.subr.bf16.mxu0 0
  %592 = vmatpush1.bf16.msra.mxu0 %v214
  %593 = vmatprep.subr.bf16.mxu0 0
  %594 = vmatpush1.bf16.msra.mxu0 %v215
  %595 = vmatprep.subr.bf16.mxu0 0
  %596 = vmatpush1.bf16.msra.mxu0 %v216
  %597 = vmatprep.subr.bf16.mxu0 0
  %598 = vmatpush1.bf16.msra.mxu0 %v217
  %599 = vmatprep.subr.bf16.mxu0 0
  %600 = vmatpush1.bf16.msra.mxu0 %v218
  %601 = vmatprep.subr.bf16.mxu0 0
  %602 = vmatpush1.bf16.msra.mxu0 %v219
  %603 = vmatprep.subr.bf16.mxu0 0
  %604 = vmatpush1.bf16.msra.mxu0 %v220
  %605 = vmatprep.subr.bf16.mxu0 0
  %606 = vmatpush1.bf16.msra.mxu0 %v221
  %607 = vmatprep.subr.bf16.mxu0 0
  %608 = vmatpush1.bf16.msra.mxu0 %v222
  %609 = vmatprep.subr.bf16.mxu0 0
  %610 = vmatpush1.bf16.msra.mxu0 %v223
  %611 = vmatprep.subr.bf16.mxu0 0
  %612 = vmatpush1.bf16.msra.mxu0 %v224
  %613 = vmatprep.mubr.bf16.mxu0 %v576
  %614 = vmatmul.mubr.bf16.gmra.mrb[0].mxu0 %v575
  %v615 = vpop.f32.mrb[0].mxu0
  %v616 = vadd.f32 0.0, %v615
  %v617 = vpop.f32.mrb[0].mxu0
  %v618 = vpop.f32.mrb[0].mxu0
  %v619 = vpop.f32.mrb[0].mxu0
  %620 = vdwg.mxu0
  %621 = vmatprep.subr.bf16.mxu0 0
  %622 = vmatpush1.bf16.msra.mxu0 %v225
  %623 = vmatprep.subr.bf16.mxu0 0
  %624 = vmatpush1.bf16.msra.mxu0 %v226
  %625 = vmatprep.subr.bf16.mxu0 0
  %626 = vmatpush1.bf16.msra.mxu0 %v227
  %627 = vmatprep.subr.bf16.mxu0 0
  %628 = vmatpush1.bf16.msra.mxu0 %v228
  %629 = vmatprep.subr.bf16.mxu0 0
  %630 = vmatpush1.bf16.msra.mxu0 %v229
  %631 = vmatprep.subr.bf16.mxu0 0
  %632 = vmatpush1.bf16.msra.mxu0 %v230
  %633 = vmatprep.subr.bf16.mxu0 0
  %634 = vmatpush1.bf16.msra.mxu0 %v260
  %635 = vmatprep.subr.bf16.mxu0 0
  %636 = vmatpush1.bf16.msra.mxu0 0
  %637 = vmatprep.subr.bf16.mxu0 0
  %638 = vmatpush1.bf16.msra.mxu0 0
  %639 = vmatprep.subr.bf16.mxu0 0
  %640 = vmatpush1.bf16.msra.mxu0 0
  %641 = vmatprep.subr.bf16.mxu0 0
  %642 = vmatpush1.bf16.msra.mxu0 0
  %643 = vmatprep.subr.bf16.mxu0 0
  %644 = vmatpush1.bf16.msra.mxu0 0
  %645 = vmatprep.subr.bf16.mxu0 0
  %646 = vmatpush1.bf16.msra.mxu0 0
  %647 = vmatprep.subr.bf16.mxu0 0
  %648 = vmatpush1.bf16.msra.mxu0 0
  %649 = vmatprep.subr.bf16.mxu0 0
  %650 = vmatpush1.bf16.msra.mxu0 0
  %651 = vmatprep.subr.bf16.mxu0 0
  %652 = vmatpush1.bf16.msra.mxu0 0
  %653 = vmatprep.mubr.bf16.mxu0 0
  %654 = vmatmul.mubr.bf16.gmra.mrb[0].mxu0 %v579
  %v655 = vpop.f32.mrb[0].mxu0
  %v656 = vadd.f32 %v616, %v655
  %v657 = vpop.f32.mrb[0].mxu0
  %v658 = vpop.f32.mrb[0].mxu0
  %v659 = vpop.f32.mrb[0].mxu0
  %660 = vdwg.mxu0
  %v661 = vmax.f32 %v337, %v441
  %663 = vrot.lane.b32.xlu0 %v661, 86
  %v664 = vpop.permute.xlu0 %663
  %v666 = vmax.f32 %v661, %v664
  %v667 = vld [vmem:[%s2] sm:$0x1]
  %v669 = vlaneseq
  %v670 = vshrl.u32 %v669, 7
  %v671 = vsub.s32 0, %v670
  %v672 = vrot.slane %v667, %v671
  %v674 = vadd.f32 %v666, %v672
  %v675 = vmax.f32 %v674, 0.0
  %v676 = vmax.f32 %v552, %v656
  %678 = vrot.lane.b32.xlu0 %v676, 86
  %v679 = vpop.permute.xlu0 %678
  %v681 = vmax.f32 %v676, %v679
  %v682 = vadd.f32 %v681, %v672
  %v683 = vmax.f32 %v682, 0.0
  %v685 = vrot.slane %v683, 6
  %vm687 = vcmask 1041408
  %v688 = vsel %vm687, 0.0, %v685
  %690 = vrot.lane.b32.xlu0 %v675, 42
  %v691 = vpop.permute.xlu0 %690
  %v694 = vrot.slane %v688, 2
  %695 = vrot.lane.b32.xlu0 %v694, 84
  %v696 = vpop.permute.xlu0 %695
  %v698 = vrot.slane %v675, 2
  %699 = vrot.lane.b32.xlu0 %v698, 126
  %v700 = vpop.permute.xlu0 %699
  %v702 = vrot.slane %v688, 4
  %703 = vrot.lane.b32.xlu0 %v702, 40
  %v704 = vpop.permute.xlu0 %703
  %vm706 = vcmask 343040
  %v707 = vsel %vm706, %v688, %v691
  %vm708 = vcmask 687104
  %v709 = vsel %vm708, %v707, %v696
  %vm710 = vcmask 1031168
  %v711 = vsel %vm710, %v709, %v700
  %vm712 = vcmask 326656
  %v713 = vsel %vm712, %v700, %v704
  %v714 = vpack.c.bf16 %v711, %v711
  %v715 = vpack.c.bf16 %v713, %v713
  %v716 = vld [vmem:[%s3] sm:$0xf]
  %v717 = vld [vmem:[%s3 + $0x4] sm:$0xf]
  %v718 = vld [vmem:[%s3 + $0x8] sm:$0xf]
  %v719 = vld [vmem:[%s3 + $0xc] sm:$0xf]
  %v720 = vld [vmem:[%s3 + $0x10] sm:$0xf]
  %v721 = vld [vmem:[%s3 + $0x14] sm:$0xf]
  %v722 = vld [vmem:[%s3 + $0x18] sm:$0xf]
  %v723 = vld [vmem:[%s3 + $0x1c] sm:$0xf]
  %v724 = vld [vmem:[%s3 + $0x20] sm:$0xf]
  %v725 = vld [vmem:[%s3 + $0x24] sm:$0xf]
  %v726 = vld [vmem:[%s3 + $0x28] sm:$0xf]
  %v727 = vld [vmem:[%s3 + $0x2c] sm:$0xf]
  %v728 = vld [vmem:[%s3 + $0x30] sm:$0xf]
  %v729 = vld [vmem:[%s3 + $0x34] sm:$0xf]
  %v730 = vld [vmem:[%s3 + $0x38] sm:$0xf]
  %v731 = vld [vmem:[%s3 + $0x3c] sm:$0xf]
  %v732 = vld [vmem:[%s3 + $0x40] sm:$0xf]
  %v733 = vld [vmem:[%s3 + $0x44] sm:$0xf]
  %v734 = vld [vmem:[%s3 + $0x48] sm:$0xf]
  %v735 = vld [vmem:[%s3 + $0x4c] sm:$0xf]
  %v736 = vld [vmem:[%s3 + $0x50] sm:$0xf]
  %v737 = vld [vmem:[%s3 + $0x54] sm:$0xf]
  %v738 = vld [vmem:[%s3 + $0x58] sm:$0xf]
  %v739 = vld [vmem:[%s3 + $0x5c] sm:$0xf]
  %v740 = vld [vmem:[%s3 + $0x60] sm:$0xf]
  %v741 = vld [vmem:[%s3 + $0x64] sm:$0xf]
  %v742 = vld [vmem:[%s3 + $0x68] sm:$0x1]
  %v770 = vunpack.c.l.b16 %v716
  %v771 = vunpack.c.l.b16 %v717
  %v772 = vunpack.c.l.b16 %v718
  %v773 = vunpack.c.l.b16 %v719
  %v774 = vunpack.c.l.b16 %v720
  %v775 = vunpack.c.l.b16 %v721
  %v776 = vunpack.c.l.b16 %v722
  %v777 = vunpack.c.l.b16 %v723
  %v778 = vunpack.c.l.b16 %v724
  %v779 = vunpack.c.l.b16 %v725
  %v780 = vunpack.c.l.b16 %v726
  %v781 = vunpack.c.l.b16 %v727
  %v782 = vunpack.c.l.b16 %v728
  %v783 = vunpack.c.l.b16 %v729
  %v784 = vunpack.c.l.b16 %v730
  %v785 = vunpack.c.l.b16 %v731
  %v786 = vunpack.c.l.b16 %v732
  %v787 = vunpack.c.l.b16 %v733
  %v788 = vunpack.c.l.b16 %v734
  %v789 = vunpack.c.l.b16 %v735
  %v790 = vunpack.c.l.b16 %v736
  %v791 = vunpack.c.l.b16 %v737
  %v792 = vunpack.c.l.b16 %v738
  %v793 = vunpack.c.l.b16 %v739
  %v794 = vunpack.c.l.b16 %v740
  %v795 = vunpack.c.l.b16 %v741
  %v796 = vunpack.c.l.b16 %v742
  %v797 = vpack.c.b16 %v771, %v770
  %v798 = vpack.c.b16 %v773, %v772
  %v799 = vpack.c.b16 %v775, %v774
  %v800 = vpack.c.b16 %v777, %v776
  %v801 = vpack.c.b16 %v779, %v778
  %v802 = vpack.c.b16 %v781, %v780
  %v803 = vpack.c.b16 %v783, %v782
  %v804 = vpack.c.b16 %v785, %v784
  %v805 = vpack.c.b16 %v787, %v786
  %v806 = vpack.c.b16 %v789, %v788
  %v807 = vpack.c.b16 %v791, %v790
  %v808 = vpack.c.b16 %v793, %v792
  %v809 = vpack.c.b16 %v795, %v794
  %v810 = vpack.c.b16 %v796, %v796
  %vm824 = vcmask 670720
  %v826 = vsel %vm824, %v715, 0
  %vm828 = vcmask 1040384
  %v830 = vsel %vm828, %v810, 0
  %832 = vmatprep.subr.bf16.mxu0 0
  %833 = vmatpush1.bf16.msra.mxu0 %v797
  %834 = vmatprep.subr.bf16.mxu0 0
  %835 = vmatpush1.bf16.msra.mxu0 %v798
  %836 = vmatprep.subr.bf16.mxu0 0
  %837 = vmatpush1.bf16.msra.mxu0 %v799
  %838 = vmatprep.subr.bf16.mxu0 0
  %839 = vmatpush1.bf16.msra.mxu0 %v800
  %840 = vmatprep.subr.bf16.mxu0 0
  %841 = vmatpush1.bf16.msra.mxu0 %v801
  %842 = vmatprep.subr.bf16.mxu0 0
  %843 = vmatpush1.bf16.msra.mxu0 %v802
  %844 = vmatprep.subr.bf16.mxu0 0
  %845 = vmatpush1.bf16.msra.mxu0 %v803
  %846 = vmatprep.subr.bf16.mxu0 0
  %847 = vmatpush1.bf16.msra.mxu0 %v804
  %848 = vmatprep.subr.bf16.mxu0 0
  %849 = vmatpush1.bf16.msra.mxu0 %v805
  %850 = vmatprep.subr.bf16.mxu0 0
  %851 = vmatpush1.bf16.msra.mxu0 %v806
  %852 = vmatprep.subr.bf16.mxu0 0
  %853 = vmatpush1.bf16.msra.mxu0 %v807
  %854 = vmatprep.subr.bf16.mxu0 0
  %855 = vmatpush1.bf16.msra.mxu0 %v808
  %856 = vmatprep.subr.bf16.mxu0 0
  %857 = vmatpush1.bf16.msra.mxu0 %v809
  %858 = vmatprep.subr.bf16.mxu0 0
  %859 = vmatpush1.bf16.msra.mxu0 %v830
  %860 = vmatprep.subr.bf16.mxu0 0
  %861 = vmatpush1.bf16.msra.mxu0 0
  %862 = vmatprep.subr.bf16.mxu0 0
  %863 = vmatpush1.bf16.msra.mxu0 0
  %864 = vmatprep.mubr.bf16.mxu0 %v826
  %865 = vmatmul.mubr.bf16.gmra.mrb[0].mxu0 %v714
  %v866 = vpop.f32.mrb[0].mxu0
  %v867 = vadd.f32 0.0, %v866
  %v868 = vpop.f32.mrb[0].mxu0
  %v869 = vpop.f32.mrb[0].mxu0
  %v870 = vpop.f32.mrb[0].mxu0
  %871 = vdwg.mxu0
  %872 = vrot.lane.b32.xlu0 %v694, 42
  %v873 = vpop.permute.xlu0 %872
  %875 = vrot.lane.b32.xlu0 %v698, 84
  %v876 = vpop.permute.xlu0 %875
  %878 = vrot.lane.b32.xlu0 %v702, 126
  %v879 = vpop.permute.xlu0 %878
  %v881 = vrot.slane %v675, 4
  %882 = vrot.lane.b32.xlu0 %v881, 40
  %v883 = vpop.permute.xlu0 %882
  %v885 = vsel %vm706, %v675, %v873
  %v886 = vsel %vm708, %v885, %v876
  %v887 = vsel %vm710, %v886, %v879
  %v888 = vsel %vm712, %v879, %v883
  %v889 = vpack.c.bf16 %v887, %v887
  %v890 = vpack.c.bf16 %v888, %v888
  %v892 = vsel %vm824, %v890, 0
  %894 = vmatprep.subr.bf16.mxu0 0
  %895 = vmatpush1.bf16.msra.mxu0 %v797
  %896 = vmatprep.subr.bf16.mxu0 0
  %897 = vmatpush1.bf16.msra.mxu0 %v798
  %898 = vmatprep.subr.bf16.mxu0 0
  %899 = vmatpush1.bf16.msra.mxu0 %v799
  %900 = vmatprep.subr.bf16.mxu0 0
  %901 = vmatpush1.bf16.msra.mxu0 %v800
  %902 = vmatprep.subr.bf16.mxu0 0
  %903 = vmatpush1.bf16.msra.mxu0 %v801
  %904 = vmatprep.subr.bf16.mxu0 0
  %905 = vmatpush1.bf16.msra.mxu0 %v802
  %906 = vmatprep.subr.bf16.mxu0 0
  %907 = vmatpush1.bf16.msra.mxu0 %v803
  %908 = vmatprep.subr.bf16.mxu0 0
  %909 = vmatpush1.bf16.msra.mxu0 %v804
  %910 = vmatprep.subr.bf16.mxu0 0
  %911 = vmatpush1.bf16.msra.mxu0 %v805
  %912 = vmatprep.subr.bf16.mxu0 0
  %913 = vmatpush1.bf16.msra.mxu0 %v806
  %914 = vmatprep.subr.bf16.mxu0 0
  %915 = vmatpush1.bf16.msra.mxu0 %v807
  %916 = vmatprep.subr.bf16.mxu0 0
  %917 = vmatpush1.bf16.msra.mxu0 %v808
  %918 = vmatprep.subr.bf16.mxu0 0
  %919 = vmatpush1.bf16.msra.mxu0 %v809
  %920 = vmatprep.subr.bf16.mxu0 0
  %921 = vmatpush1.bf16.msra.mxu0 %v830
  %922 = vmatprep.subr.bf16.mxu0 0
  %923 = vmatpush1.bf16.msra.mxu0 0
  %924 = vmatprep.subr.bf16.mxu0 0
  %925 = vmatpush1.bf16.msra.mxu0 0
  %926 = vmatprep.mubr.bf16.mxu0 %v892
  %927 = vmatmul.mubr.bf16.gmra.mrb[0].mxu0 %v889
  %v928 = vpop.f32.mrb[0].mxu0
  %v929 = vadd.f32 0.0, %v928
  %v930 = vpop.f32.mrb[0].mxu0
  %v931 = vpop.f32.mrb[0].mxu0
  %v932 = vpop.f32.mrb[0].mxu0
  %933 = vdwg.mxu0
  %v934 = vmax.f32 %v867, %v929
  %936 = vrot.lane.b32.xlu0 %v934, 96
  %v937 = vpop.permute.xlu0 %936
  %v939 = vmax.f32 %v934, %v937
  %v940 = vld [vmem:[%s4] sm:$0x1]
  %v942 = vlaneseq
  %v943 = vshrl.u32 %v942, 7
  %v944 = vsub.s32 0, %v943
  %v945 = vrot.slane %v940, %v944
  %v947 = vadd.f32 %v939, %v945
  %v948 = vmax.f32 %v947, 0.0
  %v950 = vrot.slane %v948, 2
  %951 = vrot.lane.b32.xlu0 %v950, 32
  %v952 = vpop.permute.xlu0 %951
  %v954 = vsel %vm69, %v948, %v952
  %v955 = vpack.c.bf16 %v954, %v954
  %v956 = vld [vmem:[%s5] sm:$0xf]
  %v957 = vld [vmem:[%s5 + $0x4] sm:$0xf]
  %v958 = vld [vmem:[%s5 + $0x8] sm:$0xf]
  %v959 = vld [vmem:[%s5 + $0xc] sm:$0xf]
  %v960 = vld [vmem:[%s5 + $0x10] sm:$0xf]
  %v961 = vld [vmem:[%s5 + $0x14] sm:$0xf]
  %v962 = vld [vmem:[%s5 + $0x18] sm:$0xf]
  %v963 = vld [vmem:[%s5 + $0x1c] sm:$0xf]
  %v964 = vld [vmem:[%s6] sm:$0x1]
  %v966 = vlaneseq
  %v967 = vshrl.u32 %v966, 7
  %v968 = vsub.s32 0, %v967
  %v969 = vrot.slane %v964, %v968
  %v979 = vunpack.c.l.b16 %v956
  %v980 = vunpack.c.l.b16 %v957
  %v981 = vunpack.c.l.b16 %v958
  %v982 = vunpack.c.l.b16 %v959
  %v983 = vunpack.c.l.b16 %v960
  %v984 = vunpack.c.l.b16 %v961
  %v985 = vunpack.c.l.b16 %v962
  %v986 = vunpack.c.l.b16 %v963
  %v987 = vpack.c.b16 %v980, %v979
  %v988 = vpack.c.b16 %v982, %v981
  %v989 = vpack.c.b16 %v984, %v983
  %v990 = vpack.c.b16 %v986, %v985
  %vm995 = vcmask 523264
  %v997 = vsel %vm995, %v955, 0
  %999 = vmatprep.subr.bf16.mxu0 0
  %1000 = vmatpush1.bf16.msra.mxu0 %v987
  %1001 = vmatprep.subr.bf16.mxu0 0
  %1002 = vmatpush1.bf16.msra.mxu0 %v988
  %1003 = vmatprep.subr.bf16.mxu0 0
  %1004 = vmatpush1.bf16.msra.mxu0 %v989
  %1005 = vmatprep.subr.bf16.mxu0 0
  %1006 = vmatpush1.bf16.msra.mxu0 %v990
  %1007 = vmatprep.subr.bf16.mxu0 0
  %1008 = vmatpush1.bf16.msra.mxu0 0
  %1009 = vmatprep.subr.bf16.mxu0 0
  %1010 = vmatpush1.bf16.msra.mxu0 0
  %1011 = vmatprep.subr.bf16.mxu0 0
  %1012 = vmatpush1.bf16.msra.mxu0 0
  %1013 = vmatprep.subr.bf16.mxu0 0
  %1014 = vmatpush1.bf16.msra.mxu0 0
  %1015 = vmatprep.subr.bf16.mxu0 0
  %1016 = vmatpush1.bf16.msra.mxu0 0
  %1017 = vmatprep.subr.bf16.mxu0 0
  %1018 = vmatpush1.bf16.msra.mxu0 0
  %1019 = vmatprep.subr.bf16.mxu0 0
  %1020 = vmatpush1.bf16.msra.mxu0 0
  %1021 = vmatprep.subr.bf16.mxu0 0
  %1022 = vmatpush1.bf16.msra.mxu0 0
  %1023 = vmatprep.subr.bf16.mxu0 0
  %1024 = vmatpush1.bf16.msra.mxu0 0
  %1025 = vmatprep.subr.bf16.mxu0 0
  %1026 = vmatpush1.bf16.msra.mxu0 0
  %1027 = vmatprep.subr.bf16.mxu0 0
  %1028 = vmatpush1.bf16.msra.mxu0 0
  %1029 = vmatprep.subr.bf16.mxu0 0
  %1030 = vmatpush1.bf16.msra.mxu0 0
  %1031 = vmatprep.mubr.bf16.mxu0 0
  %1032 = vmatmul.mubr.bf16.gmra.mrb[0].mxu0 %v997
  %v1033 = vpop.f32.mrb[0].mxu0
  %v1034 = vadd.f32 %v969, %v1033
  %v1035 = vpop.f32.mrb[0].mxu0
  %v1036 = vpop.f32.mrb[0].mxu0
  %v1037 = vpop.f32.mrb[0].mxu0
  %1038 = vdwg.mxu0
  %v1039 = vmax.f32 %v1034, 0.0
  %v1040 = vpack.c.bf16 %v1039, %v1039
  %v1041 = vld [vmem:[%s7] sm:$0xf]
  %v1042 = vld [vmem:[%s7 + $0x4] sm:$0xf]
  %v1043 = vld [vmem:[%s7 + $0x8] sm:$0xf]
  %v1044 = vld [vmem:[%s7 + $0xc] sm:$0xf]
  %v1045 = vld [vmem:[%s7 + $0x10] sm:$0xf]
  %v1046 = vld [vmem:[%s7 + $0x14] sm:$0xf]
  %v1047 = vld [vmem:[%s7 + $0x18] sm:$0xf]
  %v1048 = vld [vmem:[%s7 + $0x1c] sm:$0xf]
  %v1049 = vld [vmem:[%s7 + $0x20] sm:$0xf]
  %v1050 = vld [vmem:[%s7 + $0x24] sm:$0xf]
  %v1051 = vld [vmem:[%s7 + $0x28] sm:$0xf]
  %v1052 = vld [vmem:[%s7 + $0x2c] sm:$0xf]
  %v1053 = vld [vmem:[%s7 + $0x30] sm:$0xf]
  %v1054 = vld [vmem:[%s7 + $0x34] sm:$0xf]
  %v1055 = vld [vmem:[%s7 + $0x38] sm:$0xf]
  %v1056 = vld [vmem:[%s8] sm:$0x1]
  %v1058 = vlaneseq
  %v1059 = vshrl.u32 %v1058, 7
  %v1060 = vsub.s32 0, %v1059
  %v1061 = vrot.slane %v1056, %v1060
  %v1078 = vunpack.c.l.b16 %v1041
  %v1079 = vunpack.c.l.b16 %v1042
  %v1080 = vunpack.c.l.b16 %v1043
  %v1081 = vunpack.c.l.b16 %v1044
  %v1082 = vunpack.c.l.b16 %v1045
  %v1083 = vunpack.c.l.b16 %v1046
  %v1084 = vunpack.c.l.b16 %v1047
  %v1085 = vunpack.c.l.b16 %v1048
  %v1086 = vunpack.c.l.b16 %v1049
  %v1087 = vunpack.c.l.b16 %v1050
  %v1088 = vunpack.c.l.b16 %v1051
  %v1089 = vunpack.c.l.b16 %v1052
  %v1090 = vunpack.c.l.b16 %v1053
  %v1091 = vunpack.c.l.b16 %v1054
  %v1092 = vunpack.c.l.b16 %v1055
  %v1093 = vpack.c.b16 %v1079, %v1078
  %v1094 = vpack.c.b16 %v1081, %v1080
  %v1095 = vpack.c.b16 %v1083, %v1082
  %v1096 = vpack.c.b16 %v1085, %v1084
  %v1097 = vpack.c.b16 %v1087, %v1086
  %v1098 = vpack.c.b16 %v1089, %v1088
  %v1099 = vpack.c.b16 %v1091, %v1090
  %v1100 = vpack.c.b16 %v1092, %v1092
  %vm1108 = vcmask 982016
  %v1110 = vsel %vm1108, %v1040, 0
  %v1113 = vsel %vm258, %v1100, 0
  %1115 = vmatprep.subr.bf16.mxu0 0
  %1116 = vmatpush1.bf16.msra.mxu0 %v1093
  %1117 = vmatprep.subr.bf16.mxu0 0
  %1118 = vmatpush1.bf16.msra.mxu0 %v1094
  %1119 = vmatprep.subr.bf16.mxu0 0
  %1120 = vmatpush1.bf16.msra.mxu0 %v1095
  %1121 = vmatprep.subr.bf16.mxu0 0
  %1122 = vmatpush1.bf16.msra.mxu0 %v1096
  %1123 = vmatprep.subr.bf16.mxu0 0
  %1124 = vmatpush1.bf16.msra.mxu0 %v1097
  %1125 = vmatprep.subr.bf16.mxu0 0
  %1126 = vmatpush1.bf16.msra.mxu0 %v1098
  %1127 = vmatprep.subr.bf16.mxu0 0
  %1128 = vmatpush1.bf16.msra.mxu0 %v1099
  %1129 = vmatprep.subr.bf16.mxu0 0
  %1130 = vmatpush1.bf16.msra.mxu0 %v1113
  %1131 = vmatprep.subr.bf16.mxu0 0
  %1132 = vmatpush1.bf16.msra.mxu0 0
  %1133 = vmatprep.subr.bf16.mxu0 0
  %1134 = vmatpush1.bf16.msra.mxu0 0
  %1135 = vmatprep.subr.bf16.mxu0 0
  %1136 = vmatpush1.bf16.msra.mxu0 0
  %1137 = vmatprep.subr.bf16.mxu0 0
  %1138 = vmatpush1.bf16.msra.mxu0 0
  %1139 = vmatprep.subr.bf16.mxu0 0
  %1140 = vmatpush1.bf16.msra.mxu0 0
  %1141 = vmatprep.subr.bf16.mxu0 0
  %1142 = vmatpush1.bf16.msra.mxu0 0
  %1143 = vmatprep.subr.bf16.mxu0 0
  %1144 = vmatpush1.bf16.msra.mxu0 0
  %1145 = vmatprep.subr.bf16.mxu0 0
  %1146 = vmatpush1.bf16.msra.mxu0 0
  %1147 = vmatprep.mubr.bf16.mxu0 0
  %1148 = vmatmul.mubr.bf16.gmra.mrb[0].mxu0 %v1110
  %v1149 = vpop.f32.mrb[0].mxu0
  %v1150 = vadd.f32 %v1061, %v1149
  %v1151 = vpop.f32.mrb[0].mxu0
  %v1152 = vpop.f32.mrb[0].mxu0
  %v1153 = vpop.f32.mrb[0].mxu0
  %1154 = vdwg.mxu0
  %v1155 = vmax.f32 %v1150, 0.0
  %v1156 = vpack.c.bf16 %v1155, %v1155
  %v1157 = vld [vmem:[%s9] sm:$0xf]
  %v1158 = vld [vmem:[%s9 + $0x4] sm:$0xf]
  %v1159 = vld [vmem:[%s9 + $0x8] sm:$0xf]
  %v1160 = vld [vmem:[%s9 + $0xc] sm:$0xf]
  %v1161 = vld [vmem:[%s9 + $0x10] sm:$0xf]
  %v1162 = vld [vmem:[%s9 + $0x14] sm:$0xf]
  %v1163 = vld [vmem:[%s9 + $0x18] sm:$0xf]
  %v1164 = vld [vmem:[%s9 + $0x1c] sm:$0xf]
  %v1165 = vld [vmem:[%s9 + $0x20] sm:$0xf]
  %v1166 = vld [vmem:[%s9 + $0x24] sm:$0xf]
  %v1167 = vld [vmem:[%s9 + $0x28] sm:$0x3]
  %v1168 = vld [vmem:[%s10] sm:$0x1]
  %v1170 = vlaneseq
  %v1171 = vshrl.u32 %v1170, 7
  %v1172 = vsub.s32 0, %v1171
  %v1173 = vrot.slane %v1168, %v1172
  %v1186 = vunpack.c.l.b16 %v1157
  %v1187 = vunpack.c.l.b16 %v1158
  %v1188 = vunpack.c.l.b16 %v1159
  %v1189 = vunpack.c.l.b16 %v1160
  %v1190 = vunpack.c.l.b16 %v1161
  %v1191 = vunpack.c.l.b16 %v1162
  %v1192 = vunpack.c.l.b16 %v1163
  %v1193 = vunpack.c.l.b16 %v1164
  %v1194 = vunpack.c.l.b16 %v1165
  %v1195 = vunpack.c.l.b16 %v1166
  %v1196 = vunpack.c.l.b16 %v1167
  %v1197 = vpack.c.b16 %v1187, %v1186
  %v1198 = vpack.c.b16 %v1189, %v1188
  %v1199 = vpack.c.b16 %v1191, %v1190
  %v1200 = vpack.c.b16 %v1193, %v1192
  %v1201 = vpack.c.b16 %v1195, %v1194
  %v1202 = vpack.c.b16 %v1196, %v1196
  %v1209 = vsel %vm708, %v1156, 0
  %v1212 = vsel %vm687, %v1202, 0
  %1214 = vmatprep.subr.bf16.mxu0 0
  %1215 = vmatpush1.bf16.msra.mxu0 %v1197
  %1216 = vmatprep.subr.bf16.mxu0 0
  %1217 = vmatpush1.bf16.msra.mxu0 %v1198
  %1218 = vmatprep.subr.bf16.mxu0 0
  %1219 = vmatpush1.bf16.msra.mxu0 %v1199
  %1220 = vmatprep.subr.bf16.mxu0 0
  %1221 = vmatpush1.bf16.msra.mxu0 %v1200
  %1222 = vmatprep.subr.bf16.mxu0 0
  %1223 = vmatpush1.bf16.msra.mxu0 %v1201
  %1224 = vmatprep.subr.bf16.mxu0 0
  %1225 = vmatpush1.bf16.msra.mxu0 %v1212
  %1226 = vmatprep.subr.bf16.mxu0 0
  %1227 = vmatpush1.bf16.msra.mxu0 0
  %1228 = vmatprep.subr.bf16.mxu0 0
  %1229 = vmatpush1.bf16.msra.mxu0 0
  %1230 = vmatprep.subr.bf16.mxu0 0
  %1231 = vmatpush1.bf16.msra.mxu0 0
  %1232 = vmatprep.subr.bf16.mxu0 0
  %1233 = vmatpush1.bf16.msra.mxu0 0
  %1234 = vmatprep.subr.bf16.mxu0 0
  %1235 = vmatpush1.bf16.msra.mxu0 0
  %1236 = vmatprep.subr.bf16.mxu0 0
  %1237 = vmatpush1.bf16.msra.mxu0 0
  %1238 = vmatprep.subr.bf16.mxu0 0
  %1239 = vmatpush1.bf16.msra.mxu0 0
  %1240 = vmatprep.subr.bf16.mxu0 0
  %1241 = vmatpush1.bf16.msra.mxu0 0
  %1242 = vmatprep.subr.bf16.mxu0 0
  %1243 = vmatpush1.bf16.msra.mxu0 0
  %1244 = vmatprep.subr.bf16.mxu0 0
  %1245 = vmatpush1.bf16.msra.mxu0 0
  %1246 = vmatprep.mubr.bf16.mxu0 0
  %1247 = vmatmul.mubr.bf16.gmra.mrb[0].mxu0 %v1209
  %v1248 = vpop.f32.mrb[0].mxu0
  %v1249 = vadd.f32 %v1173, %v1248
  %v1250 = vpop.f32.mrb[0].mxu0
  %v1251 = vpop.f32.mrb[0].mxu0
  %v1252 = vpop.f32.mrb[0].mxu0
  %1253 = vdwg.mxu0
  %1254 = vst [vmem:[%s11] sm:$0x3] %v1249
  // Predicated region
  $region46: #{lenet_kg_forward.1} parent=0 // pred_check
    _
  $region47: #{lenet_kg_forward.1} parent=0 // pred_check_branch
    %1256 = sbr.rel (0) target = $region49
  $region48: #{lenet_kg_forward.1} parent=0 // pred_region
    _
  $region49: #{lenet_kg_forward.1} parent=0 // pred_fallthru
    _
  // Predicated region
  $region50: #{lenet_kg_forward.1} parent=0 // pred_check
    _
  $region51: #{lenet_kg_forward.1} parent=0 // pred_check_branch
    %1258 = sbr.rel (0) target = $region53
  $region52: #{lenet_kg_forward.1} parent=0 // pred_region
    _
  $region53: #{lenet_kg_forward.1} parent=0 // pred_fallthru
    _

</llo_original>
